<compile_context>
chip_gen: v5e
topology: v5e:2x2
jax: 0.10.0
libtpu: 0.0.40
codegen_flags: <defaults>
</compile_context>

<pallas_src>
import numpy as np

import jax
import jax.numpy as jnp
from jax import lax
from jax.experimental import pallas as pl
from jax.experimental.pallas import tpu as pltpu


# ----------------------------------------------------------------------------
# Parameter init (deterministic, synthetic) -- PyTorch-layout weights
# ----------------------------------------------------------------------------
def init_params(key, *, in_channels, image_size, latent_dim, base_channels,
                channel_multipliers):
    cm = list(channel_multipliers)[::-1]          # the module reverses in place
    rh = image_size[0] // 2 ** len(cm)
    rw = image_size[1] // 2 ** len(cm)
    c0 = base_channels * cm[0]
    d_out = rh * rw * c0

    key, k1, k2 = jax.random.split(key, 3)
    params = {
        "lin_w": 0.1 * jax.random.normal(k1, (d_out, latent_dim), jnp.float32),  # (out,in)
        "lin_b": 0.1 * jax.random.normal(k2, (d_out,), jnp.float32),
        "mid": [],
    }
    for c, cp in zip(cm, cm[1:]):
        cin, cout = base_channels * c, base_channels * cp
        key, kw, kg, kb = jax.random.split(key, 4)
        params["mid"].append(dict(
            w=0.1 * jax.random.normal(kw, (cin, cout, 4, 4), jnp.float32),  # ConvT (Cin,Cout,kh,kw)
            gamma=1.0 + 0.05 * jax.random.normal(kg, (cout,), jnp.float32),
            beta=0.05 * jax.random.normal(kb, (cout,), jnp.float32),
            mean=jnp.zeros((cout,), jnp.float32),
            var=jnp.ones((cout,), jnp.float32),
        ))
    c_last = base_channels * cm[-1]
    key, kf = jax.random.split(key)
    params["fc_w"] = 0.1 * jax.random.normal(kf, (in_channels, c_last, 3, 3), jnp.float32)
    return params, cm, (rh, rw)


# ----------------------------------------------------------------------------
# One-time weight preparation: materialise every conv layer as a dense linear
# operator over NCHW-flattened activations (numpy, runs once per weight set).
# ----------------------------------------------------------------------------
def prepare_weights(params, *, reduced_size):
    eps = 1e-5
    h_in, w_in = reduced_size

    prepped = {
        # Linear: y = z @ W.T + b   (columns already in the module's NCHW-flat order)
        "w0": jnp.asarray(np.asarray(params["lin_w"]).T, jnp.float32),     # (L, rh*rw*C0)
        "b0": jnp.asarray(np.asarray(params["lin_b"]).reshape(1, -1), jnp.float32),
        "mid": [],
    }

    # --- ConvTranspose2d(k=4, s=2, p=1) blocks, BN folded --------------------
    for blk in params["mid"]:
        w = np.asarray(blk["w"], np.float32)              # (Cin, Cout, 4, 4)
        cin, cout = w.shape[0], w.shape[1]
        h_out, w_out = 2 * h_in, 2 * w_in
        M = np.zeros((cin * h_in * w_in, cout * h_out * w_out), np.float32)
        rows_c = np.arange(cin) * (h_in * w_in)
        cols_c = np.arange(cout) * (h_out * w_out)
        for kh in range(4):
            for kw in range(4):
                wk = w[:, :, kh, kw]                       # (Cin, Cout)
                for ih in range(h_in):
                    oh = 2 * ih + kh - 1                   # oh = ih*s + kh - p
                    if not (0 <= oh < h_out):
                        continue
                    for iw in range(w_in):
                        ow = 2 * iw + kw - 1
                        if not (0 <= ow < w_out):
                            continue
                        r = rows_c + (ih * w_in + iw)
                        c = cols_c + (oh * w_out + ow)
                        M[np.ix_(r, c)] += wk
        scale = np.asarray(blk["gamma"]) / np.sqrt(np.asarray(blk["var"]) + eps)
        shift = np.asarray(blk["beta"]) - np.asarray(blk["mean"]) * scale
        scale_flat = np.repeat(scale, h_out * w_out).reshape(1, -1).astype(np.float32)
        shift_flat = np.repeat(shift, h_out * w_out).reshape(1, -1).astype(np.float32)
        prepped["mid"].append((jnp.asarray(M), jnp.asarray(scale_flat),
                               jnp.asarray(shift_flat)))
        h_in, w_in = h_out, w_out

    # --- final: Upsample(x2 nearest) + Conv2d(k=3, s=1, p=1) ------------------
    wf = np.asarray(params["fc_w"], np.float32)            # (Cout, Cin, 3, 3)
    cout_f, cin_f = wf.shape[0], wf.shape[1]
    hu, wu = 2 * h_in, 2 * w_in                            # == image_size
    Mf = np.zeros((cin_f * h_in * w_in, cout_f * hu * wu), np.float32)
    rows_c = np.arange(cin_f) * (h_in * w_in)
    cols_c = np.arange(cout_f) * (hu * wu)
    for kh in range(3):
        for kw in range(3):
            wkk = wf[:, :, kh, kw].T                       # (Cin, Cout)
            for oh in range(hu):
                uh = oh + kh - 1
                if not (0 <= uh < hu):
                    continue
                ih = uh // 2                               # nearest-upsample source row
                for ow in range(wu):
                    uw = ow + kw - 1
                    if not (0 <= uw < wu):
                        continue
                    iw = uw // 2
                    r = rows_c + (ih * w_in + iw)
                    c = cols_c + (oh * wu + ow)
                    Mf[np.ix_(r, c)] += wkk
    prepped["wf"] = jnp.asarray(Mf)
    prepped["out_chw"] = (cout_f, hu, wu)
    return prepped


# ----------------------------------------------------------------------------
# Single fused Pallas kernel: 3 lane-dense GEMMs + BN + LeakyReLU + Sigmoid
# ----------------------------------------------------------------------------
def _make_generator_kernel(n_mid):
    def kernel(z_ref, w0_ref, b0_ref, *refs):
        # refs = [ (w, scale, shift) * n_mid, w_final, o_ref ]
        h = jnp.dot(z_ref[...], w0_ref[...],
                    preferred_element_type=jnp.float32) + b0_ref[...]
        k = 0
        for _ in range(n_mid):
            w, sc, sh = refs[k], refs[k + 1], refs[k + 2]
            k += 3
            y = jnp.dot(h, w[...], preferred_element_type=jnp.float32)
            y = y * sc[...] + sh[...]                      # BatchNorm (eval, folded)
            h = jnp.maximum(y, 0.2 * y)                    # LeakyReLU(0.2)
        wf_ref, o_ref = refs[k], refs[k + 1]
        y = jnp.dot(h, wf_ref[...], preferred_element_type=jnp.float32)
        # sigmoid: exp on EUP, approx reciprocal on EUP (free slot)
        o_ref[...] = pl.reciprocal(1.0 + jnp.exp(-y), approx=True)
    return kernel


def generator_forward_pallas(prepped, z):
    B, L = z.shape
    C, H, W = prepped["out_chw"]
    d_out = C * H * W
    n_mid = len(prepped["mid"])

    # batch tile: single block for tiny batches; 8-aligned tiles otherwise
    if B % 8 == 0:
        tb = min(B, 256)
        while B % tb != 0:
            tb -= 8
    else:
        tb = B
    grid = (B // tb,)

    def _whole(shape):
        n = len(shape)
        return pl.BlockSpec(shape, lambda i, _n=n: (0,) * _n)

    ops = [z, prepped["w0"], prepped["b0"]]
    in_specs = [
        pl.BlockSpec((tb, L), lambda i: (i, 0)),
        _whole(prepped["w0"].shape),
        _whole(prepped["b0"].shape),
    ]
    for (w, sc, sh) in prepped["mid"]:
        ops += [w, sc, sh]
        in_specs += [_whole(w.shape), _whole(sc.shape), _whole(sh.shape)]
    ops.append(prepped["wf"])
    in_specs.append(_whole(prepped["wf"].shape))

    out = pl.pallas_call(
        _make_generator_kernel(n_mid),
        out_shape=jax.ShapeDtypeStruct((B, d_out), jnp.float32),
        grid=grid,
        in_specs=in_specs,
        out_specs=pl.BlockSpec((tb, d_out), lambda i: (i, 0)),
        compiler_params=pltpu.CompilerParams(
            dimension_semantics=("parallel",)),
    )(*ops)
    # columns are in NCHW-flat order -> free reshape, no transpose needed
    return out.reshape(B, C, H, W)


# ----------------------------------------------------------------------------
# Pure-JAX reference (lax convs) for a numeric sanity check.
# ----------------------------------------------------------------------------
def reference_forward(params, z, *, base_channels, cm, reduced_size):
    rh, rw = reduced_size
    c0 = base_channels * cm[0]
    eps = 1e-5
    h = z @ params["lin_w"].T + params["lin_b"]
    x = h.reshape(-1, c0, rh, rw).transpose(0, 2, 3, 1)
    for blk in params["mid"]:
        wk = jnp.transpose(blk["w"], (2, 3, 0, 1))[::-1, ::-1]  # flipped, HWIO
        x = lax.conv_general_dilated(
            x, wk, window_strides=(1, 1), padding=((2, 2), (2, 2)),
            lhs_dilation=(2, 2), dimension_numbers=("NHWC", "HWIO", "NHWC"),
            preferred_element_type=jnp.float32)
        scale = blk["gamma"] / jnp.sqrt(blk["var"] + eps)
        shift = blk["beta"] - blk["mean"] * scale
        x = x * scale + shift
        x = jnp.where(x > 0, x, 0.2 * x)
    x = jnp.repeat(jnp.repeat(x, 2, axis=1), 2, axis=2)
    wk = jnp.transpose(params["fc_w"], (2, 3, 1, 0))
    x = lax.conv_general_dilated(
        x, wk, (1, 1), ((1, 1), (1, 1)),
        dimension_numbers=("NHWC", "HWIO", "NHWC"),
        preferred_element_type=jnp.float32)
    x = 1.0 / (1.0 + jnp.exp(-x))
    return x.transpose(0, 3, 1, 2)


if __name__ == "__main__":
    B = 2
    in_channels = 3
    image_size = (16, 16)
    latent_dim = 32
    base_channels = 8
    channel_multipliers = [1, 2]

    key = jax.random.PRNGKey(0)
    kp, kz = jax.random.split(key)
    params, cm, reduced_size = init_params(
        kp, in_channels=in_channels, image_size=image_size, latent_dim=latent_dim,
        base_channels=base_channels, channel_multipliers=channel_multipliers)

    z = jax.random.normal(kz, (B, latent_dim), jnp.float32)

    prepped = prepare_weights(params, reduced_size=reduced_size)
    out = jax.block_until_ready(generator_forward_pallas(prepped, z))
    assert out.shape == (B, in_channels, image_size[0], image_size[1]), out.shape
    assert out.dtype == jnp.float32

    ref = jax.block_until_ready(
        reference_forward(params, z, base_channels=base_channels,
                          cm=cm, reduced_size=reduced_size))
    assert jnp.allclose(out, ref, rtol=5e-3, atol=5e-3), \
        float(jnp.max(jnp.abs(out - ref)))

    print("KERNEL_OK")
</pallas_src>

<mosaic_0001>
module attributes {stable_mosaic.version = 11 : i64} {
  func.func @kernel(%arg0: i32, %arg1: memref<2x32xf32, #tpu.memory_space<vmem>>, %arg2: memref<32x256xf32, #tpu.memory_space<vmem>>, %arg3: memref<1x256xf32, #tpu.memory_space<vmem>>, %arg4: memref<256x512xf32, #tpu.memory_space<vmem>>, %arg5: memref<1x512xf32, #tpu.memory_space<vmem>>, %arg6: memref<1x512xf32, #tpu.memory_space<vmem>>, %arg7: memref<512x768xf32, #tpu.memory_space<vmem>>, %arg8: memref<2x768xf32, #tpu.memory_space<vmem>>) attributes {dimension_semantics = [#tpu.dimension_semantics<parallel>], iteration_bounds = array<i64: 1>, scalar_prefetch = 0 : i64, scratch_operands = 0 : i64, tpu.core_type = #tpu.core_type<tc>, window_params = [{transform_indices = @transform_0, window_bounds = array<i64: 2, 32>}, {pipeline_mode = #tpu.pipeline_mode<synchronous>, transform_indices = @transform_1, window_bounds = array<i64: 32, 256>}, {pipeline_mode = #tpu.pipeline_mode<synchronous>, transform_indices = @transform_2, window_bounds = array<i64: 1, 256>}, {pipeline_mode = #tpu.pipeline_mode<synchronous>, transform_indices = @transform_3, window_bounds = array<i64: 256, 512>}, {pipeline_mode = #tpu.pipeline_mode<synchronous>, transform_indices = @transform_4, window_bounds = array<i64: 1, 512>}, {pipeline_mode = #tpu.pipeline_mode<synchronous>, transform_indices = @transform_5, window_bounds = array<i64: 1, 512>}, {pipeline_mode = #tpu.pipeline_mode<synchronous>, transform_indices = @transform_6, window_bounds = array<i64: 512, 768>}, {transform_indices = @transform_7, window_bounds = array<i64: 2, 768>}]} {
    %c0 = arith.constant 0 : index
    %c0_0 = arith.constant 0 : index
    %0 = vector.load %arg1[%c0, %c0_0] : memref<2x32xf32, #tpu.memory_space<vmem>>, vector<2x32xf32>
    %c0_1 = arith.constant 0 : index
    %c0_2 = arith.constant 0 : index
    %1 = vector.load %arg2[%c0_1, %c0_2] : memref<32x256xf32, #tpu.memory_space<vmem>>, vector<32x256xf32>
    %cst = arith.constant dense<0.000000e+00> : vector<2x256xf32>
    %2 = tpu.matmul %0, %1, %cst {dimension_numbers = #tpu.dot_dimension_numbers<[1], [0], [0], [1], [0, 0, 1, 1], [], []>} : vector<2x32xf32>, vector<32x256xf32>, vector<2x256xf32> -> vector<2x256xf32>
    %c0_3 = arith.constant 0 : index
    %c0_4 = arith.constant 0 : index
    %3 = vector.load %arg3[%c0_3, %c0_4] : memref<1x256xf32, #tpu.memory_space<vmem>>, vector<1x256xf32>
    %4 = vector.broadcast %3 : vector<1x256xf32> to vector<2x256xf32>
    %5 = arith.addf %2, %4 : vector<2x256xf32>
    %c0_5 = arith.constant 0 : index
    %c0_6 = arith.constant 0 : index
    %6 = vector.load %arg4[%c0_5, %c0_6] : memref<256x512xf32, #tpu.memory_space<vmem>>, vector<256x512xf32>
    %cst_7 = arith.constant dense<0.000000e+00> : vector<2x512xf32>
    %7 = tpu.matmul %5, %6, %cst_7 {dimension_numbers = #tpu.dot_dimension_numbers<[1], [0], [0], [1], [0, 0, 1, 1], [], []>} : vector<2x256xf32>, vector<256x512xf32>, vector<2x512xf32> -> vector<2x512xf32>
    %c0_8 = arith.constant 0 : index
    %c0_9 = arith.constant 0 : index
    %8 = vector.load %arg5[%c0_8, %c0_9] : memref<1x512xf32, #tpu.memory_space<vmem>>, vector<1x512xf32>
    %9 = vector.broadcast %8 : vector<1x512xf32> to vector<2x512xf32>
    %10 = arith.mulf %7, %9 : vector<2x512xf32>
    %c0_10 = arith.constant 0 : index
    %c0_11 = arith.constant 0 : index
    %11 = vector.load %arg6[%c0_10, %c0_11] : memref<1x512xf32, #tpu.memory_space<vmem>>, vector<1x512xf32>
    %12 = vector.broadcast %11 : vector<1x512xf32> to vector<2x512xf32>
    %13 = arith.addf %10, %12 : vector<2x512xf32>
    %cst_12 = arith.constant 2.000000e-01 : f32
    %14 = vector.broadcast %cst_12 : f32 to vector<2x512xf32>
    %15 = arith.mulf %14, %13 : vector<2x512xf32>
    %16 = arith.maximumf %13, %15 : vector<2x512xf32>
    %c0_13 = arith.constant 0 : index
    %c0_14 = arith.constant 0 : index
    %17 = vector.load %arg7[%c0_13, %c0_14] : memref<512x768xf32, #tpu.memory_space<vmem>>, vector<512x768xf32>
    %cst_15 = arith.constant dense<0.000000e+00> : vector<2x768xf32>
    %18 = tpu.matmul %16, %17, %cst_15 {dimension_numbers = #tpu.dot_dimension_numbers<[1], [0], [0], [1], [0, 0, 1, 1], [], []>} : vector<2x512xf32>, vector<512x768xf32>, vector<2x768xf32> -> vector<2x768xf32>
    %cst_16 = arith.constant 0.000000e+00 : f32
    %19 = vector.broadcast %cst_16 : f32 to vector<2x768xf32>
    %20 = arith.subf %19, %18 : vector<2x768xf32>
    %21 = math.exp %20 : vector<2x768xf32>
    %cst_17 = arith.constant 1.000000e+00 : f32
    %22 = vector.broadcast %cst_17 : f32 to vector<2x768xf32>
    %23 = arith.addf %22, %21 : vector<2x768xf32>
    %24 = tpu.reciprocal %23 {approx = true} : vector<2x768xf32> -> vector<2x768xf32>
    %c0_18 = arith.constant 0 : index
    %c0_19 = arith.constant 0 : index
    %25 = vector.load %arg8[%c0_18, %c0_19] : memref<2x768xf32, #tpu.memory_space<vmem>>, vector<2x768xf32>
    tpu.vector_store %arg8[%c0_18, %c0_19], %24 {strides = array<i32>} : memref<2x768xf32, #tpu.memory_space<vmem>>, vector<2x768xf32>,
    return
  }
  func.func @transform_0(%arg0: i32) -> (i32, i32) {
    %c0_i32 = arith.constant 0 : i32
    %c0_i32_0 = arith.constant 0 : i32
    return %arg0, %c0_i32 : i32, i32
  }
  func.func @transform_1(%arg0: i32) -> (i32, i32) {
    %c0_i32 = arith.constant 0 : i32
    %c0_i32_0 = arith.constant 0 : i32
    %c0_i32_1 = arith.constant 0 : i32
    return %c0_i32, %c0_i32_0 : i32, i32
  }
  func.func @transform_2(%arg0: i32) -> (i32, i32) {
    %c0_i32 = arith.constant 0 : i32
    %c0_i32_0 = arith.constant 0 : i32
    %c0_i32_1 = arith.constant 0 : i32
    return %c0_i32, %c0_i32_0 : i32, i32
  }
  func.func @transform_3(%arg0: i32) -> (i32, i32) {
    %c0_i32 = arith.constant 0 : i32
    %c0_i32_0 = arith.constant 0 : i32
    %c0_i32_1 = arith.constant 0 : i32
    return %c0_i32, %c0_i32_0 : i32, i32
  }
  func.func @transform_4(%arg0: i32) -> (i32, i32) {
    %c0_i32 = arith.constant 0 : i32
    %c0_i32_0 = arith.constant 0 : i32
    %c0_i32_1 = arith.constant 0 : i32
    return %c0_i32, %c0_i32_0 : i32, i32
  }
  func.func @transform_5(%arg0: i32) -> (i32, i32) {
    %c0_i32 = arith.constant 0 : i32
    %c0_i32_0 = arith.constant 0 : i32
    %c0_i32_1 = arith.constant 0 : i32
    return %c0_i32, %c0_i32_0 : i32, i32
  }
  func.func @transform_6(%arg0: i32) -> (i32, i32) {
    %c0_i32 = arith.constant 0 : i32
    %c0_i32_0 = arith.constant 0 : i32
    %c0_i32_1 = arith.constant 0 : i32
    return %c0_i32, %c0_i32_0 : i32, i32
  }
  func.func @transform_7(%arg0: i32) -> (i32, i32) {
    %c0_i32 = arith.constant 0 : i32
    %c0_i32_0 = arith.constant 0 : i32
    return %arg0, %c0_i32 : i32, i32
  }
}

</mosaic_0001>

<llo_original>
// kernel: tpu_custom_call.1
$region0: #{tpu_custom_call.1}
  #allocation0 [shape = 'u32[]', space=smem, size = 0x4, offset = 0x4, fixed_abs, tag = 'smem constant byte address 0x4 - core index']
  #allocation1 [shape = 'u32[72,128]{1,0:T(1,128)}', space=vmem, size = 0x9000, scoped, tag = 'internal scratch']
  %s0 = inlined_call_operand.hbm [shape: f32[2,32], index: 0, kind: input, shape index: {}]
  %s1 = inlined_call_operand.hbm [shape: f32[32,256], index: 1, kind: input, shape index: {}]
  %s2 = inlined_call_operand.hbm [shape: f32[1,256], index: 2, kind: input, shape index: {}]
  %s3 = inlined_call_operand.hbm [shape: f32[256,512], index: 3, kind: input, shape index: {}]
  %s4 = inlined_call_operand.hbm [shape: f32[1,512], index: 4, kind: input, shape index: {}]
  %s5 = inlined_call_operand.hbm [shape: f32[1,512], index: 5, kind: input, shape index: {}]
  %s6 = inlined_call_operand.hbm [shape: f32[512,768], index: 6, kind: input, shape index: {}]
  %s7 = inlined_call_operand.hbm [shape: f32[2,768], index: 7, kind: output, shape index: {}]
  %s8 = sld [smem:[#allocation0]]
  $region66: #{tpu_custom_call.1} parent=0
    _
  %s10 = ssub.s32 1, %s8
  %s11 = scalar_select 0, %s10, %s8
  $region1: #{tpu_custom_call.1} parent=0
    #allocation2 [shape = 'u8[1024]{0}', space=vmem, size = 0x400, scoped, tag = 'input window, operand 0, single buffered']
    #allocation3 [shape = 's32[1]{0}', space=sflag, size = 0x4, scoped, tag = 'scoped memory for tpu_custom_call.1']
    #allocation4 [shape = 's32[1]{0}', space=sflag, size = 0x4, scoped, tag = 'scoped memory for tpu_custom_call.1']
    #allocation5 [shape = 'u8[32768]{0}', space=vmem, size = 0x8000, scoped, tag = 'input window, operand 1, single buffered']
    #allocation6 [shape = 's32[1]{0}', space=sflag, size = 0x4, scoped, tag = 'scoped memory for tpu_custom_call.1']
    #allocation7 [shape = 'u8[1024]{0}', space=vmem, size = 0x400, scoped, tag = 'input window, operand 2, single buffered']
    #allocation8 [shape = 'u8[524288]{0}', space=vmem, size = 0x80000, scoped, tag = 'input window, operand 3, single buffered']
    #allocation9 [shape = 's32[1]{0}', space=sflag, size = 0x4, scoped, tag = 'scoped memory for tpu_custom_call.1']
    #allocation10 [shape = 'u8[2048]{0}', space=vmem, size = 0x800, scoped, tag = 'input window, operand 4, single buffered']
    #allocation11 [shape = 'u8[2048]{0}', space=vmem, size = 0x800, scoped, tag = 'input window, operand 5, single buffered']
    #allocation12 [shape = 's32[1]{0}', space=sflag, size = 0x4, scoped, tag = 'scoped memory for tpu_custom_call.1']
    #allocation13 [shape = 'u8[1572864]{0}', space=vmem, size = 0x180000, scoped, tag = 'input window, operand 6, single buffered']
    #allocation14 [shape = 'u8[6144]{0}', space=vmem, size = 0x1800, scoped, tag = 'output window, operand 0, single buffered']
    %12 = vsyncpa [#allocation3], 0
    %13 = vsyncpa [#allocation6], 0
    %14 = vsyncpa [#allocation9], 0
    %15 = vsyncpa [#allocation12], 0
    %16 = vsyncpa [#allocation4], 0
    // Predicated region
    $region2: #{tpu_custom_call.1} parent=1 // pred_check
      _
    $region3: #{tpu_custom_call.1} parent=1 // pred_check_branch
      %18 = sbr.rel (0) target = $region5
    $region4: #{tpu_custom_call.1} parent=1 // pred_region
      %20 = vsyncadd [#allocation3], 0
      %s22 = sshll.u32 %s0, 4
      %s23 = int_to_ptr.hbm [resolvable:$true] %s22
      %s24 = sshll.u32 [#allocation2], 4
      %s25 = int_to_ptr.vmem [resolvable:$true] %s24
      %27 = dma.hbm_to_vmem [thread:$0]  %s23, 32, %s25, [#allocation3]
    $region5: #{tpu_custom_call.1} parent=1 // pred_fallthru
      _
    // Predicated region
    $region6: #{tpu_custom_call.1} parent=1 // pred_check
      _
    $region7: #{tpu_custom_call.1} parent=1 // pred_check_branch
      %29 = sbr.rel (0) target = $region9
    $region8: #{tpu_custom_call.1} parent=1 // pred_region
      %31 = vsyncadd [#allocation6], 0
      %s32 = sshll.u32 %s1, 4
      %s33 = int_to_ptr.hbm [resolvable:$true] %s32
      %s34 = sshll.u32 [#allocation5], 4
      %s35 = int_to_ptr.vmem [resolvable:$true] %s34
      %40 = dma.hbm_to_vmem [thread:$0]  %s33, 1024, %s35, [#allocation6], 256, 256, 16
    $region9: #{tpu_custom_call.1} parent=1 // pred_fallthru
      _
    // Predicated region
    $region10: #{tpu_custom_call.1} parent=1 // pred_check
      _
    $region11: #{tpu_custom_call.1} parent=1 // pred_check_branch
      %42 = sbr.rel (0) target = $region13
    $region12: #{tpu_custom_call.1} parent=1 // pred_region
      %44 = vsyncadd [#allocation6], 0
      %s46 = sshll.u32 %s2, 4
      %s47 = int_to_ptr.hbm [resolvable:$true] %s46
      %s48 = sshll.u32 [#allocation7], 4
      %s49 = int_to_ptr.vmem [resolvable:$true] %s48
      %51 = dma.hbm_to_vmem [thread:$0]  %s47, 32, %s49, [#allocation6]
    $region13: #{tpu_custom_call.1} parent=1 // pred_fallthru
      _
    // Predicated region
    $region14: #{tpu_custom_call.1} parent=1 // pred_check
      _
    $region15: #{tpu_custom_call.1} parent=1 // pred_check_branch
      %53 = sbr.rel (0) target = $region17
    $region16: #{tpu_custom_call.1} parent=1 // pred_region
      %55 = vsyncadd [#allocation9], 0
      %s56 = sshll.u32 %s3, 4
      %s57 = int_to_ptr.hbm [resolvable:$true] %s56
      %s58 = sshll.u32 [#allocation8], 4
      %s59 = int_to_ptr.vmem [resolvable:$true] %s58
      %64 = dma.hbm_to_vmem [thread:$0]  %s57, 16384, %s59, [#allocation9], 512, 512, 32
    $region17: #{tpu_custom_call.1} parent=1 // pred_fallthru
      _
    // Predicated region
    $region18: #{tpu_custom_call.1} parent=1 // pred_check
      _
    $region19: #{tpu_custom_call.1} parent=1 // pred_check_branch
      %66 = sbr.rel (0) target = $region21
    $region20: #{tpu_custom_call.1} parent=1 // pred_region
      %68 = vsyncadd [#allocation9], 0
      %s70 = sshll.u32 %s4, 4
      %s71 = int_to_ptr.hbm [resolvable:$true] %s70
      %s72 = sshll.u32 [#allocation10], 4
      %s73 = int_to_ptr.vmem [resolvable:$true] %s72
      %75 = dma.hbm_to_vmem [thread:$0]  %s71, 64, %s73, [#allocation9]
    $region21: #{tpu_custom_call.1} parent=1 // pred_fallthru
      _
    // Predicated region
    $region22: #{tpu_custom_call.1} parent=1 // pred_check
      _
    $region23: #{tpu_custom_call.1} parent=1 // pred_check_branch
      %77 = sbr.rel (0) target = $region25
    $region24: #{tpu_custom_call.1} parent=1 // pred_region
      %79 = vsyncadd [#allocation12], 0
      %s81 = sshll.u32 %s5, 4
      %s82 = int_to_ptr.hbm [resolvable:$true] %s81
      %s83 = sshll.u32 [#allocation11], 4
      %s84 = int_to_ptr.vmem [resolvable:$true] %s83
      %86 = dma.hbm_to_vmem [thread:$0]  %s82, 64, %s84, [#allocation12]
    $region25: #{tpu_custom_call.1} parent=1 // pred_fallthru
      _
    // Predicated region
    $region26: #{tpu_custom_call.1} parent=1 // pred_check
      _
    $region27: #{tpu_custom_call.1} parent=1 // pred_check_branch
      %88 = sbr.rel (0) target = $region29
    $region28: #{tpu_custom_call.1} parent=1 // pred_region
      %90 = vsyncadd [#allocation12], 0
      %s91 = sshll.u32 %s6, 4
      %s92 = int_to_ptr.hbm [resolvable:$true] %s91
      %s93 = sshll.u32 [#allocation13], 4
      %s94 = int_to_ptr.vmem [resolvable:$true] %s93
      %99 = dma.hbm_to_vmem [thread:$0]  %s92, 49152, %s94, [#allocation12], 768, 768, 48
    $region29: #{tpu_custom_call.1} parent=1 // pred_fallthru
      _
    // Predicated region
    $region30: #{tpu_custom_call.1} parent=1 // pred_check
      _
    $region31: #{tpu_custom_call.1} parent=1 // pred_check_branch
      %101 = sbr.rel (0) target = $region33
    $region32: #{tpu_custom_call.1} parent=1 // pred_region
      %103 = dma.done [#allocation3], 32
    $region33: #{tpu_custom_call.1} parent=1 // pred_fallthru
      _
    // Predicated region
    $region34: #{tpu_custom_call.1} parent=1 // pred_check
      _
    $region35: #{tpu_custom_call.1} parent=1 // pred_check_branch
      %105 = sbr.rel (0) target = $region37
    $region36: #{tpu_custom_call.1} parent=1 // pred_region
      %107 = dma.done [#allocation6], 1024
    $region37: #{tpu_custom_call.1} parent=1 // pred_fallthru
      _
    // Predicated region
    $region38: #{tpu_custom_call.1} parent=1 // pred_check
      _
    $region39: #{tpu_custom_call.1} parent=1 // pred_check_branch
      %109 = sbr.rel (0) target = $region41
    $region40: #{tpu_custom_call.1} parent=1 // pred_region
      %111 = dma.done [#allocation6], 32
    $region41: #{tpu_custom_call.1} parent=1 // pred_fallthru
      _
    // Predicated region
    $region42: #{tpu_custom_call.1} parent=1 // pred_check
      _
    $region43: #{tpu_custom_call.1} parent=1 // pred_check_branch
      %113 = sbr.rel (0) target = $region45
    $region44: #{tpu_custom_call.1} parent=1 // pred_region
      %115 = dma.done [#allocation9], 16384
    $region45: #{tpu_custom_call.1} parent=1 // pred_fallthru
      _
    // Predicated region
    $region46: #{tpu_custom_call.1} parent=1 // pred_check
      _
    $region47: #{tpu_custom_call.1} parent=1 // pred_check_branch
      %117 = sbr.rel (0) target = $region49
    $region48: #{tpu_custom_call.1} parent=1 // pred_region
      %119 = dma.done [#allocation9], 64
    $region49: #{tpu_custom_call.1} parent=1 // pred_fallthru
      _
    // Predicated region
    $region50: #{tpu_custom_call.1} parent=1 // pred_check
      _
    $region51: #{tpu_custom_call.1} parent=1 // pred_check_branch
      %121 = sbr.rel (0) target = $region53
    $region52: #{tpu_custom_call.1} parent=1 // pred_region
      %123 = dma.done [#allocation12], 64
    $region53: #{tpu_custom_call.1} parent=1 // pred_fallthru
      _
    // Predicated region
    $region54: #{tpu_custom_call.1} parent=1 // pred_check
      _
    $region55: #{tpu_custom_call.1} parent=1 // pred_check_branch
      %125 = sbr.rel (0) target = $region57
    $region56: #{tpu_custom_call.1} parent=1 // pred_region
      %127 = dma.done [#allocation12], 49152
    $region57: #{tpu_custom_call.1} parent=1 // pred_fallthru
      _
    %v128 = vld [vmem:[#allocation2] sm:$0x3]
    %v129 = vld [vmem:[#allocation5] sm:$0xff]
    %v130 = vld [vmem:[#allocation5 + $0x8] sm:$0xff]
    %v131 = vld [vmem:[#allocation5 + $0x10] sm:$0xff]
    %v132 = vld [vmem:[#allocation5 + $0x18] sm:$0xff]
    %v133 = vld [vmem:[#allocation5 + $0x20] sm:$0xff]
    %v134 = vld [vmem:[#allocation5 + $0x28] sm:$0xff]
    %v135 = vld [vmem:[#allocation5 + $0x30] sm:$0xff]
    %v136 = vld [vmem:[#allocation5 + $0x38] sm:$0xff]
    %v137 = vld [vmem:[#allocation7] sm:$0x3]
    %v139 = vperm.slane %v137, 0
    %v140 = vperm.slane %v137, 1
    %vm143 = vcmask 261120
    %v145 = vsel %vm143, %v128, 0
    %147 = vmatpush.msra.mxu0 0.0
    %148 = vmatpush.msra.mxu0 0.0
    %149 = vmatpush.msra.mxu0 0.0
    %150 = vmatpush.msra.mxu0 0.0
    %151 = vmatpush.msra.mxu0 0.0
    %152 = vmatpush.msra.mxu0 0.0
    %153 = vmatpush.msra.mxu0 0.0
    %154 = vmatpush.msra.mxu0 0.0
    %155 = vmatpush.msra.mxu0 0.0
    %156 = vmatpush.msra.mxu0 0.0
    %157 = vmatpush.msra.mxu0 0.0
    %158 = vmatpush.msra.mxu0 0.0
    %159 = vmatpush.msra.mxu0 %v135
    %160 = vmatpush.msra.mxu0 %v133
    %161 = vmatpush.msra.mxu0 %v131
    %162 = vmatpush.msra.mxu0 %v129
    %163 = vmatmul.f32.gmra.mxu0 %v145
    %v164 = vpop.f32.mrf.mxu0
    %v165 = vadd.f32 %v139, %v164
    %166 = vdwg.mxu0
    %167 = vmatpush.msra.mxu0 0.0
    %168 = vmatpush.msra.mxu0 0.0
    %169 = vmatpush.msra.mxu0 0.0
    %170 = vmatpush.msra.mxu0 0.0
    %171 = vmatpush.msra.mxu0 0.0
    %172 = vmatpush.msra.mxu0 0.0
    %173 = vmatpush.msra.mxu0 0.0
    %174 = vmatpush.msra.mxu0 0.0
    %175 = vmatpush.msra.mxu0 0.0
    %176 = vmatpush.msra.mxu0 0.0
    %177 = vmatpush.msra.mxu0 0.0
    %178 = vmatpush.msra.mxu0 0.0
    %179 = vmatpush.msra.mxu0 %v136
    %180 = vmatpush.msra.mxu0 %v134
    %181 = vmatpush.msra.mxu0 %v132
    %182 = vmatpush.msra.mxu0 %v130
    %183 = vmatmul.f32.gmra.mxu0 %v145
    %v184 = vpop.f32.mrf.mxu0
    %v185 = vadd.f32 %v140, %v184
    %186 = vdwg.mxu0
    %v187 = vld [vmem:[#allocation8] sm:$0xff]
    %v188 = vld [vmem:[#allocation8 + $0x8] sm:$0xff]
    %v189 = vld [vmem:[#allocation8 + $0x10] sm:$0xff]
    %v190 = vld [vmem:[#allocation8 + $0x18] sm:$0xff]
    %v191 = vld [vmem:[#allocation8 + $0x20] sm:$0xff]
    %v192 = vld [vmem:[#allocation8 + $0x28] sm:$0xff]
    %v193 = vld [vmem:[#allocation8 + $0x30] sm:$0xff]
    %v194 = vld [vmem:[#allocation8 + $0x38] sm:$0xff]
    %v195 = vld [vmem:[#allocation8 + $0x40] sm:$0xff]
    %v196 = vld [vmem:[#allocation8 + $0x48] sm:$0xff]
    %v197 = vld [vmem:[#allocation8 + $0x50] sm:$0xff]
    %v198 = vld [vmem:[#allocation8 + $0x58] sm:$0xff]
    %v199 = vld [vmem:[#allocation8 + $0x60] sm:$0xff]
    %v200 = vld [vmem:[#allocation8 + $0x68] sm:$0xff]
    %v201 = vld [vmem:[#allocation8 + $0x70] sm:$0xff]
    %v202 = vld [vmem:[#allocation8 + $0x78] sm:$0xff]
    %v203 = vld [vmem:[#allocation8 + $0x80] sm:$0xff]
    %v204 = vld [vmem:[#allocation8 + $0x88] sm:$0xff]
    %v205 = vld [vmem:[#allocation8 + $0x90] sm:$0xff]
    %v206 = vld [vmem:[#allocation8 + $0x98] sm:$0xff]
    %v207 = vld [vmem:[#allocation8 + $0xa0] sm:$0xff]
    %v208 = vld [vmem:[#allocation8 + $0xa8] sm:$0xff]
    %v209 = vld [vmem:[#allocation8 + $0xb0] sm:$0xff]
    %v210 = vld [vmem:[#allocation8 + $0xb8] sm:$0xff]
    %v211 = vld [vmem:[#allocation8 + $0xc0] sm:$0xff]
    %v212 = vld [vmem:[#allocation8 + $0xc8] sm:$0xff]
    %v213 = vld [vmem:[#allocation8 + $0xd0] sm:$0xff]
    %v214 = vld [vmem:[#allocation8 + $0xd8] sm:$0xff]
    %v215 = vld [vmem:[#allocation8 + $0xe0] sm:$0xff]
    %v216 = vld [vmem:[#allocation8 + $0xe8] sm:$0xff]
    %v217 = vld [vmem:[#allocation8 + $0xf0] sm:$0xff]
    %v218 = vld [vmem:[#allocation8 + $0xf8] sm:$0xff]
    %v219 = vld [vmem:[#allocation8 + $0x100] sm:$0xff]
    %v220 = vld [vmem:[#allocation8 + $0x108] sm:$0xff]
    %v221 = vld [vmem:[#allocation8 + $0x110] sm:$0xff]
    %v222 = vld [vmem:[#allocation8 + $0x118] sm:$0xff]
    %v223 = vld [vmem:[#allocation8 + $0x120] sm:$0xff]
    %v224 = vld [vmem:[#allocation8 + $0x128] sm:$0xff]
    %v225 = vld [vmem:[#allocation8 + $0x130] sm:$0xff]
    %v226 = vld [vmem:[#allocation8 + $0x138] sm:$0xff]
    %v227 = vld [vmem:[#allocation8 + $0x140] sm:$0xff]
    %v228 = vld [vmem:[#allocation8 + $0x148] sm:$0xff]
    %v229 = vld [vmem:[#allocation8 + $0x150] sm:$0xff]
    %v230 = vld [vmem:[#allocation8 + $0x158] sm:$0xff]
    %v231 = vld [vmem:[#allocation8 + $0x160] sm:$0xff]
    %v232 = vld [vmem:[#allocation8 + $0x168] sm:$0xff]
    %v233 = vld [vmem:[#allocation8 + $0x170] sm:$0xff]
    %v234 = vld [vmem:[#allocation8 + $0x178] sm:$0xff]
    %v235 = vld [vmem:[#allocation8 + $0x180] sm:$0xff]
    %v236 = vld [vmem:[#allocation8 + $0x188] sm:$0xff]
    %v237 = vld [vmem:[#allocation8 + $0x190] sm:$0xff]
    %v238 = vld [vmem:[#allocation8 + $0x198] sm:$0xff]
    %v239 = vld [vmem:[#allocation8 + $0x1a0] sm:$0xff]
    %v240 = vld [vmem:[#allocation8 + $0x1a8] sm:$0xff]
    %v241 = vld [vmem:[#allocation8 + $0x1b0] sm:$0xff]
    %v242 = vld [vmem:[#allocation8 + $0x1b8] sm:$0xff]
    %v243 = vld [vmem:[#allocation8 + $0x1c0] sm:$0xff]
    %v244 = vld [vmem:[#allocation8 + $0x1c8] sm:$0xff]
    %v245 = vld [vmem:[#allocation8 + $0x1d0] sm:$0xff]
    %v246 = vld [vmem:[#allocation8 + $0x1d8] sm:$0xff]
    %v247 = vld [vmem:[#allocation8 + $0x1e0] sm:$0xff]
    %v248 = vld [vmem:[#allocation8 + $0x1e8] sm:$0xff]
    %v249 = vld [vmem:[#allocation8 + $0x1f0] sm:$0xff]
    %v250 = vld [vmem:[#allocation8 + $0x1f8] sm:$0xff]
    %v251 = vld [vmem:[#allocation8 + $0x200] sm:$0xff]
    %v252 = vld [vmem:[#allocation8 + $0x208] sm:$0xff]
    %v253 = vld [vmem:[#allocation8 + $0x210] sm:$0xff]
    %v254 = vld [vmem:[#allocation8 + $0x218] sm:$0xff]
    %v255 = vld [vmem:[#allocation8 + $0x220] sm:$0xff]
    %v256 = vld [vmem:[#allocation8 + $0x228] sm:$0xff]
    %v257 = vld [vmem:[#allocation8 + $0x230] sm:$0xff]
    %v258 = vld [vmem:[#allocation8 + $0x238] sm:$0xff]
    %v259 = vld [vmem:[#allocation8 + $0x240] sm:$0xff]
    %v260 = vld [vmem:[#allocation8 + $0x248] sm:$0xff]
    %v261 = vld [vmem:[#allocation8 + $0x250] sm:$0xff]
    %v262 = vld [vmem:[#allocation8 + $0x258] sm:$0xff]
    %v263 = vld [vmem:[#allocation8 + $0x260] sm:$0xff]
    %v264 = vld [vmem:[#allocation8 + $0x268] sm:$0xff]
    %v265 = vld [vmem:[#allocation8 + $0x270] sm:$0xff]
    %v266 = vld [vmem:[#allocation8 + $0x278] sm:$0xff]
    %v267 = vld [vmem:[#allocation8 + $0x280] sm:$0xff]
    %v268 = vld [vmem:[#allocation8 + $0x288] sm:$0xff]
    %v269 = vld [vmem:[#allocation8 + $0x290] sm:$0xff]
    %v270 = vld [vmem:[#allocation8 + $0x298] sm:$0xff]
    %v271 = vld [vmem:[#allocation8 + $0x2a0] sm:$0xff]
    %v272 = vld [vmem:[#allocation8 + $0x2a8] sm:$0xff]
    %v273 = vld [vmem:[#allocation8 + $0x2b0] sm:$0xff]
    %v274 = vld [vmem:[#allocation8 + $0x2b8] sm:$0xff]
    %v275 = vld [vmem:[#allocation8 + $0x2c0] sm:$0xff]
    %v276 = vld [vmem:[#allocation8 + $0x2c8] sm:$0xff]
    %v277 = vld [vmem:[#allocation8 + $0x2d0] sm:$0xff]
    %v278 = vld [vmem:[#allocation8 + $0x2d8] sm:$0xff]
    %v279 = vld [vmem:[#allocation8 + $0x2e0] sm:$0xff]
    %v280 = vld [vmem:[#allocation8 + $0x2e8] sm:$0xff]
    %v281 = vld [vmem:[#allocation8 + $0x2f0] sm:$0xff]
    %v282 = vld [vmem:[#allocation8 + $0x2f8] sm:$0xff]
    %v283 = vld [vmem:[#allocation8 + $0x300] sm:$0xff]
    %v284 = vld [vmem:[#allocation8 + $0x308] sm:$0xff]
    %v285 = vld [vmem:[#allocation8 + $0x310] sm:$0xff]
    %v286 = vld [vmem:[#allocation8 + $0x318] sm:$0xff]
    %v287 = vld [vmem:[#allocation8 + $0x320] sm:$0xff]
    %v288 = vld [vmem:[#allocation8 + $0x328] sm:$0xff]
    %v289 = vld [vmem:[#allocation8 + $0x330] sm:$0xff]
    %v290 = vld [vmem:[#allocation8 + $0x338] sm:$0xff]
    %v291 = vld [vmem:[#allocation8 + $0x340] sm:$0xff]
    %v292 = vld [vmem:[#allocation8 + $0x348] sm:$0xff]
    %v293 = vld [vmem:[#allocation8 + $0x350] sm:$0xff]
    %v294 = vld [vmem:[#allocation8 + $0x358] sm:$0xff]
    %v295 = vld [vmem:[#allocation8 + $0x360] sm:$0xff]
    %v296 = vld [vmem:[#allocation8 + $0x368] sm:$0xff]
    %v297 = vld [vmem:[#allocation8 + $0x370] sm:$0xff]
    %v298 = vld [vmem:[#allocation8 + $0x378] sm:$0xff]
    %v299 = vld [vmem:[#allocation8 + $0x380] sm:$0xff]
    %v300 = vld [vmem:[#allocation8 + $0x388] sm:$0xff]
    %v301 = vld [vmem:[#allocation8 + $0x390] sm:$0xff]
    %v302 = vld [vmem:[#allocation8 + $0x398] sm:$0xff]
    %v303 = vld [vmem:[#allocation8 + $0x3a0] sm:$0xff]
    %v304 = vld [vmem:[#allocation8 + $0x3a8] sm:$0xff]
    %v305 = vld [vmem:[#allocation8 + $0x3b0] sm:$0xff]
    %v306 = vld [vmem:[#allocation8 + $0x3b8] sm:$0xff]
    %v307 = vld [vmem:[#allocation8 + $0x3c0] sm:$0xff]
    %v308 = vld [vmem:[#allocation8 + $0x3c8] sm:$0xff]
    %v309 = vld [vmem:[#allocation8 + $0x3d0] sm:$0xff]
    %v310 = vld [vmem:[#allocation8 + $0x3d8] sm:$0xff]
    %v311 = vld [vmem:[#allocation8 + $0x3e0] sm:$0xff]
    %v312 = vld [vmem:[#allocation8 + $0x3e8] sm:$0xff]
    %v313 = vld [vmem:[#allocation8 + $0x3f0] sm:$0xff]
    %v314 = vld [vmem:[#allocation8 + $0x3f8] sm:$0xff]
    %315 = vmatpush.msra.mxu0 %v247
    %316 = vmatpush.msra.mxu0 %v243
    %317 = vmatpush.msra.mxu0 %v239
    %318 = vmatpush.msra.mxu0 %v235
    %319 = vmatpush.msra.mxu0 %v231
    %320 = vmatpush.msra.mxu0 %v227
    %321 = vmatpush.msra.mxu0 %v223
    %322 = vmatpush.msra.mxu0 %v219
    %323 = vmatpush.msra.mxu0 %v215
    %324 = vmatpush.msra.mxu0 %v211
    %325 = vmatpush.msra.mxu0 %v207
    %326 = vmatpush.msra.mxu0 %v203
    %327 = vmatpush.msra.mxu0 %v199
    %328 = vmatpush.msra.mxu0 %v195
    %329 = vmatpush.msra.mxu0 %v191
    %330 = vmatpush.msra.mxu0 %v187
    %331 = vmatmul.f32.gmra.mxu0 %v165
    %v332 = vpop.f32.mrf.mxu0
    %v333 = vadd.f32 0.0, %v332
    %334 = vdwg.mxu0
    %335 = vmatpush.msra.mxu0 %v311
    %336 = vmatpush.msra.mxu0 %v307
    %337 = vmatpush.msra.mxu0 %v303
    %338 = vmatpush.msra.mxu0 %v299
    %339 = vmatpush.msra.mxu0 %v295
    %340 = vmatpush.msra.mxu0 %v291
    %341 = vmatpush.msra.mxu0 %v287
    %342 = vmatpush.msra.mxu0 %v283
    %343 = vmatpush.msra.mxu0 %v279
    %344 = vmatpush.msra.mxu0 %v275
    %345 = vmatpush.msra.mxu0 %v271
    %346 = vmatpush.msra.mxu0 %v267
    %347 = vmatpush.msra.mxu0 %v263
    %348 = vmatpush.msra.mxu0 %v259
    %349 = vmatpush.msra.mxu0 %v255
    %350 = vmatpush.msra.mxu0 %v251
    %351 = vmatmul.f32.gmra.mxu0 %v185
    %v352 = vpop.f32.mrf.mxu0
    %v353 = vadd.f32 %v333, %v352
    %354 = vdwg.mxu0
    %355 = vmatpush.msra.mxu0 %v248
    %356 = vmatpush.msra.mxu0 %v244
    %357 = vmatpush.msra.mxu0 %v240
    %358 = vmatpush.msra.mxu0 %v236
    %359 = vmatpush.msra.mxu0 %v232
    %360 = vmatpush.msra.mxu0 %v228
    %361 = vmatpush.msra.mxu0 %v224
    %362 = vmatpush.msra.mxu0 %v220
    %363 = vmatpush.msra.mxu0 %v216
    %364 = vmatpush.msra.mxu0 %v212
    %365 = vmatpush.msra.mxu0 %v208
    %366 = vmatpush.msra.mxu0 %v204
    %367 = vmatpush.msra.mxu0 %v200
    %368 = vmatpush.msra.mxu0 %v196
    %369 = vmatpush.msra.mxu0 %v192
    %370 = vmatpush.msra.mxu0 %v188
    %371 = vmatmul.f32.gmra.mxu0 %v165
    %v372 = vpop.f32.mrf.mxu0
    %v373 = vadd.f32 0.0, %v372
    %374 = vdwg.mxu0
    %375 = vmatpush.msra.mxu0 %v312
    %376 = vmatpush.msra.mxu0 %v308
    %377 = vmatpush.msra.mxu0 %v304
    %378 = vmatpush.msra.mxu0 %v300
    %379 = vmatpush.msra.mxu0 %v296
    %380 = vmatpush.msra.mxu0 %v292
    %381 = vmatpush.msra.mxu0 %v288
    %382 = vmatpush.msra.mxu0 %v284
    %383 = vmatpush.msra.mxu0 %v280
    %384 = vmatpush.msra.mxu0 %v276
    %385 = vmatpush.msra.mxu0 %v272
    %386 = vmatpush.msra.mxu0 %v268
    %387 = vmatpush.msra.mxu0 %v264
    %388 = vmatpush.msra.mxu0 %v260
    %389 = vmatpush.msra.mxu0 %v256
    %390 = vmatpush.msra.mxu0 %v252
    %391 = vmatmul.f32.gmra.mxu0 %v185
    %v392 = vpop.f32.mrf.mxu0
    %v393 = vadd.f32 %v373, %v392
    %394 = vdwg.mxu0
    %395 = vmatpush.msra.mxu0 %v249
    %396 = vmatpush.msra.mxu0 %v245
    %397 = vmatpush.msra.mxu0 %v241
    %398 = vmatpush.msra.mxu0 %v237
    %399 = vmatpush.msra.mxu0 %v233
    %400 = vmatpush.msra.mxu0 %v229
    %401 = vmatpush.msra.mxu0 %v225
    %402 = vmatpush.msra.mxu0 %v221
    %403 = vmatpush.msra.mxu0 %v217
    %404 = vmatpush.msra.mxu0 %v213
    %405 = vmatpush.msra.mxu0 %v209
    %406 = vmatpush.msra.mxu0 %v205
    %407 = vmatpush.msra.mxu0 %v201
    %408 = vmatpush.msra.mxu0 %v197
    %409 = vmatpush.msra.mxu0 %v193
    %410 = vmatpush.msra.mxu0 %v189
    %411 = vmatmul.f32.gmra.mxu0 %v165
    %v412 = vpop.f32.mrf.mxu0
    %v413 = vadd.f32 0.0, %v412
    %414 = vdwg.mxu0
    %415 = vmatpush.msra.mxu0 %v313
    %416 = vmatpush.msra.mxu0 %v309
    %417 = vmatpush.msra.mxu0 %v305
    %418 = vmatpush.msra.mxu0 %v301
    %419 = vmatpush.msra.mxu0 %v297
    %420 = vmatpush.msra.mxu0 %v293
    %421 = vmatpush.msra.mxu0 %v289
    %422 = vmatpush.msra.mxu0 %v285
    %423 = vmatpush.msra.mxu0 %v281
    %424 = vmatpush.msra.mxu0 %v277
    %425 = vmatpush.msra.mxu0 %v273
    %426 = vmatpush.msra.mxu0 %v269
    %427 = vmatpush.msra.mxu0 %v265
    %428 = vmatpush.msra.mxu0 %v261
    %429 = vmatpush.msra.mxu0 %v257
    %430 = vmatpush.msra.mxu0 %v253
    %431 = vmatmul.f32.gmra.mxu0 %v185
    %v432 = vpop.f32.mrf.mxu0
    %v433 = vadd.f32 %v413, %v432
    %434 = vdwg.mxu0
    %435 = vmatpush.msra.mxu0 %v250
    %436 = vmatpush.msra.mxu0 %v246
    %437 = vmatpush.msra.mxu0 %v242
    %438 = vmatpush.msra.mxu0 %v238
    %439 = vmatpush.msra.mxu0 %v234
    %440 = vmatpush.msra.mxu0 %v230
    %441 = vmatpush.msra.mxu0 %v226
    %442 = vmatpush.msra.mxu0 %v222
    %443 = vmatpush.msra.mxu0 %v218
    %444 = vmatpush.msra.mxu0 %v214
    %445 = vmatpush.msra.mxu0 %v210
    %446 = vmatpush.msra.mxu0 %v206
    %447 = vmatpush.msra.mxu0 %v202
    %448 = vmatpush.msra.mxu0 %v198
    %449 = vmatpush.msra.mxu0 %v194
    %450 = vmatpush.msra.mxu0 %v190
    %451 = vmatmul.f32.gmra.mxu0 %v165
    %v452 = vpop.f32.mrf.mxu0
    %v453 = vadd.f32 0.0, %v452
    %454 = vdwg.mxu0
    %455 = vmatpush.msra.mxu0 %v314
    %456 = vmatpush.msra.mxu0 %v310
    %457 = vmatpush.msra.mxu0 %v306
    %458 = vmatpush.msra.mxu0 %v302
    %459 = vmatpush.msra.mxu0 %v298
    %460 = vmatpush.msra.mxu0 %v294
    %461 = vmatpush.msra.mxu0 %v290
    %462 = vmatpush.msra.mxu0 %v286
    %463 = vmatpush.msra.mxu0 %v282
    %464 = vmatpush.msra.mxu0 %v278
    %465 = vmatpush.msra.mxu0 %v274
    %466 = vmatpush.msra.mxu0 %v270
    %467 = vmatpush.msra.mxu0 %v266
    %468 = vmatpush.msra.mxu0 %v262
    %469 = vmatpush.msra.mxu0 %v258
    %470 = vmatpush.msra.mxu0 %v254
    %471 = vmatmul.f32.gmra.mxu0 %v185
    %v472 = vpop.f32.mrf.mxu0
    %v473 = vadd.f32 %v453, %v472
    %474 = vdwg.mxu0
    %v475 = vld [vmem:[#allocation10] sm:$0xf]
    %v477 = vperm.slane %v475, 0
    %v478 = vperm.slane %v475, 1
    %v479 = vperm.slane %v475, 2
    %v480 = vperm.slane %v475, 3
    %v485 = vmul.f32 %v353, %v477
    %v486 = vmul.f32 %v393, %v478
    %v487 = vmul.f32 %v433, %v479
    %v488 = vmul.f32 %v473, %v480
    %v489 = vld [vmem:[#allocation11] sm:$0xf]
    %v491 = vperm.slane %v489, 0
    %v492 = vperm.slane %v489, 1
    %v493 = vperm.slane %v489, 2
    %v494 = vperm.slane %v489, 3
    %v499 = vadd.f32 %v485, %v491
    %v500 = vadd.f32 %v486, %v492
    %v501 = vadd.f32 %v487, %v493
    %v502 = vadd.f32 %v488, %v494
    %v503 = vmul.f32 %v499, 0.2
    %v504 = vmul.f32 %v500, 0.2
    %v505 = vmul.f32 %v501, 0.2
    %v506 = vmul.f32 %v502, 0.2
    %v507 = vmax.f32 %v499, %v503
    %v508 = vmax.f32 %v500, %v504
    %v509 = vmax.f32 %v501, %v505
    %v510 = vmax.f32 %v502, %v506
    %v511 = vld [vmem:[#allocation13] sm:$0xff]
    %v512 = vld [vmem:[#allocation13 + $0x8] sm:$0xff]
    %v513 = vld [vmem:[#allocation13 + $0x10] sm:$0xff]
    %v514 = vld [vmem:[#allocation13 + $0x18] sm:$0xff]
    %v515 = vld [vmem:[#allocation13 + $0x20] sm:$0xff]
    %v516 = vld [vmem:[#allocation13 + $0x28] sm:$0xff]
    %v517 = vld [vmem:[#allocation13 + $0x30] sm:$0xff]
    %v518 = vld [vmem:[#allocation13 + $0x38] sm:$0xff]
    %v519 = vld [vmem:[#allocation13 + $0x40] sm:$0xff]
    %v520 = vld [vmem:[#allocation13 + $0x48] sm:$0xff]
    %v521 = vld [vmem:[#allocation13 + $0x50] sm:$0xff]
    %v522 = vld [vmem:[#allocation13 + $0x58] sm:$0xff]
    %v523 = vld [vmem:[#allocation13 + $0x60] sm:$0xff]
    %v524 = vld [vmem:[#allocation13 + $0x68] sm:$0xff]
    %v525 = vld [vmem:[#allocation13 + $0x70] sm:$0xff]
    %v526 = vld [vmem:[#allocation13 + $0x78] sm:$0xff]
    %v527 = vld [vmem:[#allocation13 + $0x80] sm:$0xff]
    %v528 = vld [vmem:[#allocation13 + $0x88] sm:$0xff]
    %v529 = vld [vmem:[#allocation13 + $0x90] sm:$0xff]
    %v530 = vld [vmem:[#allocation13 + $0x98] sm:$0xff]
    %v531 = vld [vmem:[#allocation13 + $0xa0] sm:$0xff]
    %v532 = vld [vmem:[#allocation13 + $0xa8] sm:$0xff]
    %v533 = vld [vmem:[#allocation13 + $0xb0] sm:$0xff]
    %v534 = vld [vmem:[#allocation13 + $0xb8] sm:$0xff]
    %v535 = vld [vmem:[#allocation13 + $0xc0] sm:$0xff]
    %v536 = vld [vmem:[#allocation13 + $0xc8] sm:$0xff]
    %v537 = vld [vmem:[#allocation13 + $0xd0] sm:$0xff]
    %v538 = vld [vmem:[#allocation13 + $0xd8] sm:$0xff]
    %v539 = vld [vmem:[#allocation13 + $0xe0] sm:$0xff]
    %v540 = vld [vmem:[#allocation13 + $0xe8] sm:$0xff]
    %v541 = vld [vmem:[#allocation13 + $0xf0] sm:$0xff]
    %v542 = vld [vmem:[#allocation13 + $0xf8] sm:$0xff]
    %v543 = vld [vmem:[#allocation13 + $0x100] sm:$0xff]
    %v544 = vld [vmem:[#allocation13 + $0x108] sm:$0xff]
    %v545 = vld [vmem:[#allocation13 + $0x110] sm:$0xff]
    %v546 = vld [vmem:[#allocation13 + $0x118] sm:$0xff]
    %v547 = vld [vmem:[#allocation13 + $0x120] sm:$0xff]
    %v548 = vld [vmem:[#allocation13 + $0x128] sm:$0xff]
    %v549 = vld [vmem:[#allocation13 + $0x130] sm:$0xff]
    %v550 = vld [vmem:[#allocation13 + $0x138] sm:$0xff]
    %v551 = vld [vmem:[#allocation13 + $0x140] sm:$0xff]
    %v552 = vld [vmem:[#allocation13 + $0x148] sm:$0xff]
    %v553 = vld [vmem:[#allocation13 + $0x150] sm:$0xff]
    %v554 = vld [vmem:[#allocation13 + $0x158] sm:$0xff]
    %v555 = vld [vmem:[#allocation13 + $0x160] sm:$0xff]
    %v556 = vld [vmem:[#allocation13 + $0x168] sm:$0xff]
    %v557 = vld [vmem:[#allocation13 + $0x170] sm:$0xff]
    %v558 = vld [vmem:[#allocation13 + $0x178] sm:$0xff]
    %v559 = vld [vmem:[#allocation13 + $0x180] sm:$0xff]
    %v560 = vld [vmem:[#allocation13 + $0x188] sm:$0xff]
    %v561 = vld [vmem:[#allocation13 + $0x190] sm:$0xff]
    %v562 = vld [vmem:[#allocation13 + $0x198] sm:$0xff]
    %v563 = vld [vmem:[#allocation13 + $0x1a0] sm:$0xff]
    %v564 = vld [vmem:[#allocation13 + $0x1a8] sm:$0xff]
    %v565 = vld [vmem:[#allocation13 + $0x1b0] sm:$0xff]
    %v566 = vld [vmem:[#allocation13 + $0x1b8] sm:$0xff]
    %v567 = vld [vmem:[#allocation13 + $0x1c0] sm:$0xff]
    %v568 = vld [vmem:[#allocation13 + $0x1c8] sm:$0xff]
    %v569 = vld [vmem:[#allocation13 + $0x1d0] sm:$0xff]
    %v570 = vld [vmem:[#allocation13 + $0x1d8] sm:$0xff]
    %v571 = vld [vmem:[#allocation13 + $0x1e0] sm:$0xff]
    %v572 = vld [vmem:[#allocation13 + $0x1e8] sm:$0xff]
    %v573 = vld [vmem:[#allocation13 + $0x1f0] sm:$0xff]
    %v574 = vld [vmem:[#allocation13 + $0x1f8] sm:$0xff]
    %v575 = vld [vmem:[#allocation13 + $0x200] sm:$0xff]
    %v576 = vld [vmem:[#allocation13 + $0x208] sm:$0xff]
    %v577 = vld [vmem:[#allocation13 + $0x210] sm:$0xff]
    %v578 = vld [vmem:[#allocation13 + $0x218] sm:$0xff]
    %v579 = vld [vmem:[#allocation13 + $0x220] sm:$0xff]
    %v580 = vld [vmem:[#allocation13 + $0x228] sm:$0xff]
    %v581 = vld [vmem:[#allocation13 + $0x230] sm:$0xff]
    %v582 = vld [vmem:[#allocation13 + $0x238] sm:$0xff]
    %v583 = vld [vmem:[#allocation13 + $0x240] sm:$0xff]
    %v584 = vld [vmem:[#allocation13 + $0x248] sm:$0xff]
    %v585 = vld [vmem:[#allocation13 + $0x250] sm:$0xff]
    %v586 = vld [vmem:[#allocation13 + $0x258] sm:$0xff]
    %v587 = vld [vmem:[#allocation13 + $0x260] sm:$0xff]
    %v588 = vld [vmem:[#allocation13 + $0x268] sm:$0xff]
    %v589 = vld [vmem:[#allocation13 + $0x270] sm:$0xff]
    %v590 = vld [vmem:[#allocation13 + $0x278] sm:$0xff]
    %v591 = vld [vmem:[#allocation13 + $0x280] sm:$0xff]
    %v592 = vld [vmem:[#allocation13 + $0x288] sm:$0xff]
    %v593 = vld [vmem:[#allocation13 + $0x290] sm:$0xff]
    %v594 = vld [vmem:[#allocation13 + $0x298] sm:$0xff]
    %v595 = vld [vmem:[#allocation13 + $0x2a0] sm:$0xff]
    %v596 = vld [vmem:[#allocation13 + $0x2a8] sm:$0xff]
    %v597 = vld [vmem:[#allocation13 + $0x2b0] sm:$0xff]
    %v598 = vld [vmem:[#allocation13 + $0x2b8] sm:$0xff]
    %v599 = vld [vmem:[#allocation13 + $0x2c0] sm:$0xff]
    %v600 = vld [vmem:[#allocation13 + $0x2c8] sm:$0xff]
    %v601 = vld [vmem:[#allocation13 + $0x2d0] sm:$0xff]
    %v602 = vld [vmem:[#allocation13 + $0x2d8] sm:$0xff]
    %v603 = vld [vmem:[#allocation13 + $0x2e0] sm:$0xff]
    %v604 = vld [vmem:[#allocation13 + $0x2e8] sm:$0xff]
    %v605 = vld [vmem:[#allocation13 + $0x2f0] sm:$0xff]
    %v606 = vld [vmem:[#allocation13 + $0x2f8] sm:$0xff]
    %v607 = vld [vmem:[#allocation13 + $0x300] sm:$0xff]
    %v608 = vld [vmem:[#allocation13 + $0x308] sm:$0xff]
    %v609 = vld [vmem:[#allocation13 + $0x310] sm:$0xff]
    %v610 = vld [vmem:[#allocation13 + $0x318] sm:$0xff]
    %v611 = vld [vmem:[#allocation13 + $0x320] sm:$0xff]
    %v612 = vld [vmem:[#allocation13 + $0x328] sm:$0xff]
    %v613 = vld [vmem:[#allocation13 + $0x330] sm:$0xff]
    %v614 = vld [vmem:[#allocation13 + $0x338] sm:$0xff]
    %v615 = vld [vmem:[#allocation13 + $0x340] sm:$0xff]
    %v616 = vld [vmem:[#allocation13 + $0x348] sm:$0xff]
    %v617 = vld [vmem:[#allocation13 + $0x350] sm:$0xff]
    %v618 = vld [vmem:[#allocation13 + $0x358] sm:$0xff]
    %v619 = vld [vmem:[#allocation13 + $0x360] sm:$0xff]
    %v620 = vld [vmem:[#allocation13 + $0x368] sm:$0xff]
    %v621 = vld [vmem:[#allocation13 + $0x370] sm:$0xff]
    %v622 = vld [vmem:[#allocation13 + $0x378] sm:$0xff]
    %v623 = vld [vmem:[#allocation13 + $0x380] sm:$0xff]
    %v624 = vld [vmem:[#allocation13 + $0x388] sm:$0xff]
    %v625 = vld [vmem:[#allocation13 + $0x390] sm:$0xff]
    %v626 = vld [vmem:[#allocation13 + $0x398] sm:$0xff]
    %v627 = vld [vmem:[#allocation13 + $0x3a0] sm:$0xff]
    %v628 = vld [vmem:[#allocation13 + $0x3a8] sm:$0xff]
    %v629 = vld [vmem:[#allocation13 + $0x3b0] sm:$0xff]
    %v630 = vld [vmem:[#allocation13 + $0x3b8] sm:$0xff]
    %v631 = vld [vmem:[#allocation13 + $0x3c0] sm:$0xff]
    %v632 = vld [vmem:[#allocation13 + $0x3c8] sm:$0xff]
    %v633 = vld [vmem:[#allocation13 + $0x3d0] sm:$0xff]
    %v634 = vld [vmem:[#allocation13 + $0x3d8] sm:$0xff]
    %v635 = vld [vmem:[#allocation13 + $0x3e0] sm:$0xff]
    %v636 = vld [vmem:[#allocation13 + $0x3e8] sm:$0xff]
    %v637 = vld [vmem:[#allocation13 + $0x3f0] sm:$0xff]
    %v638 = vld [vmem:[#allocation13 + $0x3f8] sm:$0xff]
    %v639 = vld [vmem:[#allocation13 + $0x400] sm:$0xff]
    %v640 = vld [vmem:[#allocation13 + $0x408] sm:$0xff]
    %v641 = vld [vmem:[#allocation13 + $0x410] sm:$0xff]
    %v642 = vld [vmem:[#allocation13 + $0x418] sm:$0xff]
    %v643 = vld [vmem:[#allocation13 + $0x420] sm:$0xff]
    %v644 = vld [vmem:[#allocation13 + $0x428] sm:$0xff]
    %v645 = vld [vmem:[#allocation13 + $0x430] sm:$0xff]
    %v646 = vld [vmem:[#allocation13 + $0x438] sm:$0xff]
    %v647 = vld [vmem:[#allocation13 + $0x440] sm:$0xff]
    %v648 = vld [vmem:[#allocation13 + $0x448] sm:$0xff]
    %v649 = vld [vmem:[#allocation13 + $0x450] sm:$0xff]
    %v650 = vld [vmem:[#allocation13 + $0x458] sm:$0xff]
    %v651 = vld [vmem:[#allocation13 + $0x460] sm:$0xff]
    %v652 = vld [vmem:[#allocation13 + $0x468] sm:$0xff]
    %v653 = vld [vmem:[#allocation13 + $0x470] sm:$0xff]
    %v654 = vld [vmem:[#allocation13 + $0x478] sm:$0xff]
    %v655 = vld [vmem:[#allocation13 + $0x480] sm:$0xff]
    %v656 = vld [vmem:[#allocation13 + $0x488] sm:$0xff]
    %v657 = vld [vmem:[#allocation13 + $0x490] sm:$0xff]
    %v658 = vld [vmem:[#allocation13 + $0x498] sm:$0xff]
    %v659 = vld [vmem:[#allocation13 + $0x4a0] sm:$0xff]
    %v660 = vld [vmem:[#allocation13 + $0x4a8] sm:$0xff]
    %v661 = vld [vmem:[#allocation13 + $0x4b0] sm:$0xff]
    %v662 = vld [vmem:[#allocation13 + $0x4b8] sm:$0xff]
    %v663 = vld [vmem:[#allocation13 + $0x4c0] sm:$0xff]
    %v664 = vld [vmem:[#allocation13 + $0x4c8] sm:$0xff]
    %v665 = vld [vmem:[#allocation13 + $0x4d0] sm:$0xff]
    %v666 = vld [vmem:[#allocation13 + $0x4d8] sm:$0xff]
    %v667 = vld [vmem:[#allocation13 + $0x4e0] sm:$0xff]
    %v668 = vld [vmem:[#allocation13 + $0x4e8] sm:$0xff]
    %v669 = vld [vmem:[#allocation13 + $0x4f0] sm:$0xff]
    %v670 = vld [vmem:[#allocation13 + $0x4f8] sm:$0xff]
    %v671 = vld [vmem:[#allocation13 + $0x500] sm:$0xff]
    %v672 = vld [vmem:[#allocation13 + $0x508] sm:$0xff]
    %v673 = vld [vmem:[#allocation13 + $0x510] sm:$0xff]
    %v674 = vld [vmem:[#allocation13 + $0x518] sm:$0xff]
    %v675 = vld [vmem:[#allocation13 + $0x520] sm:$0xff]
    %v676 = vld [vmem:[#allocation13 + $0x528] sm:$0xff]
    %v677 = vld [vmem:[#allocation13 + $0x530] sm:$0xff]
    %v678 = vld [vmem:[#allocation13 + $0x538] sm:$0xff]
    %v679 = vld [vmem:[#allocation13 + $0x540] sm:$0xff]
    %v680 = vld [vmem:[#allocation13 + $0x548] sm:$0xff]
    %v681 = vld [vmem:[#allocation13 + $0x550] sm:$0xff]
    %v682 = vld [vmem:[#allocation13 + $0x558] sm:$0xff]
    %v683 = vld [vmem:[#allocation13 + $0x560] sm:$0xff]
    %v684 = vld [vmem:[#allocation13 + $0x568] sm:$0xff]
    %v685 = vld [vmem:[#allocation13 + $0x570] sm:$0xff]
    %v686 = vld [vmem:[#allocation13 + $0x578] sm:$0xff]
    %v687 = vld [vmem:[#allocation13 + $0x580] sm:$0xff]
    %v688 = vld [vmem:[#allocation13 + $0x588] sm:$0xff]
    %v689 = vld [vmem:[#allocation13 + $0x590] sm:$0xff]
    %v690 = vld [vmem:[#allocation13 + $0x598] sm:$0xff]
    %v691 = vld [vmem:[#allocation13 + $0x5a0] sm:$0xff]
    %v692 = vld [vmem:[#allocation13 + $0x5a8] sm:$0xff]
    %v693 = vld [vmem:[#allocation13 + $0x5b0] sm:$0xff]
    %v694 = vld [vmem:[#allocation13 + $0x5b8] sm:$0xff]
    %v695 = vld [vmem:[#allocation13 + $0x5c0] sm:$0xff]
    %v696 = vld [vmem:[#allocation13 + $0x5c8] sm:$0xff]
    %v697 = vld [vmem:[#allocation13 + $0x5d0] sm:$0xff]
    %v698 = vld [vmem:[#allocation13 + $0x5d8] sm:$0xff]
    %v699 = vld [vmem:[#allocation13 + $0x5e0] sm:$0xff]
    %v700 = vld [vmem:[#allocation13 + $0x5e8] sm:$0xff]
    %v701 = vld [vmem:[#allocation13 + $0x5f0] sm:$0xff]
    %v702 = vld [vmem:[#allocation13 + $0x5f8] sm:$0xff]
    %v703 = vld [vmem:[#allocation13 + $0x600] sm:$0xff]
    %v704 = vld [vmem:[#allocation13 + $0x608] sm:$0xff]
    %v705 = vld [vmem:[#allocation13 + $0x610] sm:$0xff]
    %v706 = vld [vmem:[#allocation13 + $0x618] sm:$0xff]
    %v707 = vld [vmem:[#allocation13 + $0x620] sm:$0xff]
    %v708 = vld [vmem:[#allocation13 + $0x628] sm:$0xff]
    %v709 = vld [vmem:[#allocation13 + $0x630] sm:$0xff]
    %v710 = vld [vmem:[#allocation13 + $0x638] sm:$0xff]
    %v711 = vld [vmem:[#allocation13 + $0x640] sm:$0xff]
    %v712 = vld [vmem:[#allocation13 + $0x648] sm:$0xff]
    %v713 = vld [vmem:[#allocation13 + $0x650] sm:$0xff]
    %v714 = vld [vmem:[#allocation13 + $0x658] sm:$0xff]
    %v715 = vld [vmem:[#allocation13 + $0x660] sm:$0xff]
    %v716 = vld [vmem:[#allocation13 + $0x668] sm:$0xff]
    %v717 = vld [vmem:[#allocation13 + $0x670] sm:$0xff]
    %v718 = vld [vmem:[#allocation13 + $0x678] sm:$0xff]
    %v719 = vld [vmem:[#allocation13 + $0x680] sm:$0xff]
    %v720 = vld [vmem:[#allocation13 + $0x688] sm:$0xff]
    %v721 = vld [vmem:[#allocation13 + $0x690] sm:$0xff]
    %v722 = vld [vmem:[#allocation13 + $0x698] sm:$0xff]
    %v723 = vld [vmem:[#allocation13 + $0x6a0] sm:$0xff]
    %v724 = vld [vmem:[#allocation13 + $0x6a8] sm:$0xff]
    %v725 = vld [vmem:[#allocation13 + $0x6b0] sm:$0xff]
    %v726 = vld [vmem:[#allocation13 + $0x6b8] sm:$0xff]
    %v727 = vld [vmem:[#allocation13 + $0x6c0] sm:$0xff]
    %v728 = vld [vmem:[#allocation13 + $0x6c8] sm:$0xff]
    %v729 = vld [vmem:[#allocation13 + $0x6d0] sm:$0xff]
    %v730 = vld [vmem:[#allocation13 + $0x6d8] sm:$0xff]
    %v731 = vld [vmem:[#allocation13 + $0x6e0] sm:$0xff]
    %v732 = vld [vmem:[#allocation13 + $0x6e8] sm:$0xff]
    %v733 = vld [vmem:[#allocation13 + $0x6f0] sm:$0xff]
    %v734 = vld [vmem:[#allocation13 + $0x6f8] sm:$0xff]
    %v735 = vld [vmem:[#allocation13 + $0x700] sm:$0xff]
    %v736 = vld [vmem:[#allocation13 + $0x708] sm:$0xff]
    %v737 = vld [vmem:[#allocation13 + $0x710] sm:$0xff]
    %v738 = vld [vmem:[#allocation13 + $0x718] sm:$0xff]
    %v739 = vld [vmem:[#allocation13 + $0x720] sm:$0xff]
    %v740 = vld [vmem:[#allocation13 + $0x728] sm:$0xff]
    %v741 = vld [vmem:[#allocation13 + $0x730] sm:$0xff]
    %v742 = vld [vmem:[#allocation13 + $0x738] sm:$0xff]
    %v743 = vld [vmem:[#allocation13 + $0x740] sm:$0xff]
    %v744 = vld [vmem:[#allocation13 + $0x748] sm:$0xff]
    %v745 = vld [vmem:[#allocation13 + $0x750] sm:$0xff]
    %v746 = vld [vmem:[#allocation13 + $0x758] sm:$0xff]
    %v747 = vld [vmem:[#allocation13 + $0x760] sm:$0xff]
    %v748 = vld [vmem:[#allocation13 + $0x768] sm:$0xff]
    %v749 = vld [vmem:[#allocation13 + $0x770] sm:$0xff]
    %v750 = vld [vmem:[#allocation13 + $0x778] sm:$0xff]
    %v751 = vld [vmem:[#allocation13 + $0x780] sm:$0xff]
    %v752 = vld [vmem:[#allocation13 + $0x788] sm:$0xff]
    %v753 = vld [vmem:[#allocation13 + $0x790] sm:$0xff]
    %v754 = vld [vmem:[#allocation13 + $0x798] sm:$0xff]
    %v755 = vld [vmem:[#allocation13 + $0x7a0] sm:$0xff]
    %v756 = vld [vmem:[#allocation13 + $0x7a8] sm:$0xff]
    %v757 = vld [vmem:[#allocation13 + $0x7b0] sm:$0xff]
    %v758 = vld [vmem:[#allocation13 + $0x7b8] sm:$0xff]
    %v759 = vld [vmem:[#allocation13 + $0x7c0] sm:$0xff]
    %v760 = vld [vmem:[#allocation13 + $0x7c8] sm:$0xff]
    %v761 = vld [vmem:[#allocation13 + $0x7d0] sm:$0xff]
    %v762 = vld [vmem:[#allocation13 + $0x7d8] sm:$0xff]
    %v763 = vld [vmem:[#allocation13 + $0x7e0] sm:$0xff]
    %v764 = vld [vmem:[#allocation13 + $0x7e8] sm:$0xff]
    %v765 = vld [vmem:[#allocation13 + $0x7f0] sm:$0xff]
    %v766 = vld [vmem:[#allocation13 + $0x7f8] sm:$0xff]
    %v767 = vld [vmem:[#allocation13 + $0x800] sm:$0xff]
    %v768 = vld [vmem:[#allocation13 + $0x808] sm:$0xff]
    %v769 = vld [vmem:[#allocation13 + $0x810] sm:$0xff]
    %v770 = vld [vmem:[#allocation13 + $0x818] sm:$0xff]
    %v771 = vld [vmem:[#allocation13 + $0x820] sm:$0xff]
    %v772 = vld [vmem:[#allocation13 + $0x828] sm:$0xff]
    %v773 = vld [vmem:[#allocation13 + $0x830] sm:$0xff]
    %v774 = vld [vmem:[#allocation13 + $0x838] sm:$0xff]
    %v775 = vld [vmem:[#allocation13 + $0x840] sm:$0xff]
    %v776 = vld [vmem:[#allocation13 + $0x848] sm:$0xff]
    %v777 = vld [vmem:[#allocation13 + $0x850] sm:$0xff]
    %v778 = vld [vmem:[#allocation13 + $0x858] sm:$0xff]
    %v779 = vld [vmem:[#allocation13 + $0x860] sm:$0xff]
    %v780 = vld [vmem:[#allocation13 + $0x868] sm:$0xff]
    %v781 = vld [vmem:[#allocation13 + $0x870] sm:$0xff]
    %v782 = vld [vmem:[#allocation13 + $0x878] sm:$0xff]
    %v783 = vld [vmem:[#allocation13 + $0x880] sm:$0xff]
    %v784 = vld [vmem:[#allocation13 + $0x888] sm:$0xff]
    %v785 = vld [vmem:[#allocation13 + $0x890] sm:$0xff]
    %v786 = vld [vmem:[#allocation13 + $0x898] sm:$0xff]
    %v787 = vld [vmem:[#allocation13 + $0x8a0] sm:$0xff]
    %v788 = vld [vmem:[#allocation13 + $0x8a8] sm:$0xff]
    %v789 = vld [vmem:[#allocation13 + $0x8b0] sm:$0xff]
    %v790 = vld [vmem:[#allocation13 + $0x8b8] sm:$0xff]
    %v791 = vld [vmem:[#allocation13 + $0x8c0] sm:$0xff]
    %v792 = vld [vmem:[#allocation13 + $0x8c8] sm:$0xff]
    %v793 = vld [vmem:[#allocation13 + $0x8d0] sm:$0xff]
    %v794 = vld [vmem:[#allocation13 + $0x8d8] sm:$0xff]
    %v795 = vld [vmem:[#allocation13 + $0x8e0] sm:$0xff]
    %v796 = vld [vmem:[#allocation13 + $0x8e8] sm:$0xff]
    %v797 = vld [vmem:[#allocation13 + $0x8f0] sm:$0xff]
    %v798 = vld [vmem:[#allocation13 + $0x8f8] sm:$0xff]
    %v799 = vld [vmem:[#allocation13 + $0x900] sm:$0xff]
    %v800 = vld [vmem:[#allocation13 + $0x908] sm:$0xff]
    %v801 = vld [vmem:[#allocation13 + $0x910] sm:$0xff]
    %v802 = vld [vmem:[#allocation13 + $0x918] sm:$0xff]
    %v803 = vld [vmem:[#allocation13 + $0x920] sm:$0xff]
    %v804 = vld [vmem:[#allocation13 + $0x928] sm:$0xff]
    %v805 = vld [vmem:[#allocation13 + $0x930] sm:$0xff]
    %v806 = vld [vmem:[#allocation13 + $0x938] sm:$0xff]
    %v807 = vld [vmem:[#allocation13 + $0x940] sm:$0xff]
    %v808 = vld [vmem:[#allocation13 + $0x948] sm:$0xff]
    %v809 = vld [vmem:[#allocation13 + $0x950] sm:$0xff]
    %v810 = vld [vmem:[#allocation13 + $0x958] sm:$0xff]
    %v811 = vld [vmem:[#allocation13 + $0x960] sm:$0xff]
    %v812 = vld [vmem:[#allocation13 + $0x968] sm:$0xff]
    %v813 = vld [vmem:[#allocation13 + $0x970] sm:$0xff]
    %v814 = vld [vmem:[#allocation13 + $0x978] sm:$0xff]
    %v815 = vld [vmem:[#allocation13 + $0x980] sm:$0xff]
    %v816 = vld [vmem:[#allocation13 + $0x988] sm:$0xff]
    %v817 = vld [vmem:[#allocation13 + $0x990] sm:$0xff]
    %v818 = vld [vmem:[#allocation13 + $0x998] sm:$0xff]
    %v819 = vld [vmem:[#allocation13 + $0x9a0] sm:$0xff]
    %v820 = vld [vmem:[#allocation13 + $0x9a8] sm:$0xff]
    %v821 = vld [vmem:[#allocation13 + $0x9b0] sm:$0xff]
    %v822 = vld [vmem:[#allocation13 + $0x9b8] sm:$0xff]
    %v823 = vld [vmem:[#allocation13 + $0x9c0] sm:$0xff]
    %v824 = vld [vmem:[#allocation13 + $0x9c8] sm:$0xff]
    %v825 = vld [vmem:[#allocation13 + $0x9d0] sm:$0xff]
    %v826 = vld [vmem:[#allocation13 + $0x9d8] sm:$0xff]
    %v827 = vld [vmem:[#allocation13 + $0x9e0] sm:$0xff]
    %v828 = vld [vmem:[#allocation13 + $0x9e8] sm:$0xff]
    %v829 = vld [vmem:[#allocation13 + $0x9f0] sm:$0xff]
    %v830 = vld [vmem:[#allocation13 + $0x9f8] sm:$0xff]
    %v831 = vld [vmem:[#allocation13 + $0xa00] sm:$0xff]
    %v832 = vld [vmem:[#allocation13 + $0xa08] sm:$0xff]
    %v833 = vld [vmem:[#allocation13 + $0xa10] sm:$0xff]
    %v834 = vld [vmem:[#allocation13 + $0xa18] sm:$0xff]
    %v835 = vld [vmem:[#allocation13 + $0xa20] sm:$0xff]
    %v836 = vld [vmem:[#allocation13 + $0xa28] sm:$0xff]
    %v837 = vld [vmem:[#allocation13 + $0xa30] sm:$0xff]
    %v838 = vld [vmem:[#allocation13 + $0xa38] sm:$0xff]
    %v839 = vld [vmem:[#allocation13 + $0xa40] sm:$0xff]
    %v840 = vld [vmem:[#allocation13 + $0xa48] sm:$0xff]
    %v841 = vld [vmem:[#allocation13 + $0xa50] sm:$0xff]
    %v842 = vld [vmem:[#allocation13 + $0xa58] sm:$0xff]
    %v843 = vld [vmem:[#allocation13 + $0xa60] sm:$0xff]
    %v844 = vld [vmem:[#allocation13 + $0xa68] sm:$0xff]
    %v845 = vld [vmem:[#allocation13 + $0xa70] sm:$0xff]
    %v846 = vld [vmem:[#allocation13 + $0xa78] sm:$0xff]
    %v847 = vld [vmem:[#allocation13 + $0xa80] sm:$0xff]
    %v848 = vld [vmem:[#allocation13 + $0xa88] sm:$0xff]
    %v849 = vld [vmem:[#allocation13 + $0xa90] sm:$0xff]
    %v850 = vld [vmem:[#allocation13 + $0xa98] sm:$0xff]
    %v851 = vld [vmem:[#allocation13 + $0xaa0] sm:$0xff]
    %v852 = vld [vmem:[#allocation13 + $0xaa8] sm:$0xff]
    %v853 = vld [vmem:[#allocation13 + $0xab0] sm:$0xff]
    %v854 = vld [vmem:[#allocation13 + $0xab8] sm:$0xff]
    %v855 = vld [vmem:[#allocation13 + $0xac0] sm:$0xff]
    %v856 = vld [vmem:[#allocation13 + $0xac8] sm:$0xff]
    %v857 = vld [vmem:[#allocation13 + $0xad0] sm:$0xff]
    %v858 = vld [vmem:[#allocation13 + $0xad8] sm:$0xff]
    %v859 = vld [vmem:[#allocation13 + $0xae0] sm:$0xff]
    %v860 = vld [vmem:[#allocation13 + $0xae8] sm:$0xff]
    %v861 = vld [vmem:[#allocation13 + $0xaf0] sm:$0xff]
    %v862 = vld [vmem:[#allocation13 + $0xaf8] sm:$0xff]
    %v863 = vld [vmem:[#allocation13 + $0xb00] sm:$0xff]
    %v864 = vld [vmem:[#allocation13 + $0xb08] sm:$0xff]
    %v865 = vld [vmem:[#allocation13 + $0xb10] sm:$0xff]
    %v866 = vld [vmem:[#allocation13 + $0xb18] sm:$0xff]
    %v867 = vld [vmem:[#allocation13 + $0xb20] sm:$0xff]
    %v868 = vld [vmem:[#allocation13 + $0xb28] sm:$0xff]
    %v869 = vld [vmem:[#allocation13 + $0xb30] sm:$0xff]
    %v870 = vld [vmem:[#allocation13 + $0xb38] sm:$0xff]
    %v871 = vld [vmem:[#allocation13 + $0xb40] sm:$0xff]
    %v872 = vld [vmem:[#allocation13 + $0xb48] sm:$0xff]
    %v873 = vld [vmem:[#allocation13 + $0xb50] sm:$0xff]
    %v874 = vld [vmem:[#allocation13 + $0xb58] sm:$0xff]
    %v875 = vld [vmem:[#allocation13 + $0xb60] sm:$0xff]
    %v876 = vld [vmem:[#allocation13 + $0xb68] sm:$0xff]
    %v877 = vld [vmem:[#allocation13 + $0xb70] sm:$0xff]
    %v878 = vld [vmem:[#allocation13 + $0xb78] sm:$0xff]
    %v879 = vld [vmem:[#allocation13 + $0xb80] sm:$0xff]
    %v880 = vld [vmem:[#allocation13 + $0xb88] sm:$0xff]
    %v881 = vld [vmem:[#allocation13 + $0xb90] sm:$0xff]
    %v882 = vld [vmem:[#allocation13 + $0xb98] sm:$0xff]
    %v883 = vld [vmem:[#allocation13 + $0xba0] sm:$0xff]
    %v884 = vld [vmem:[#allocation13 + $0xba8] sm:$0xff]
    %v885 = vld [vmem:[#allocation13 + $0xbb0] sm:$0xff]
    %v886 = vld [vmem:[#allocation13 + $0xbb8] sm:$0xff]
    %v887 = vld [vmem:[#allocation13 + $0xbc0] sm:$0xff]
    %v888 = vld [vmem:[#allocation13 + $0xbc8] sm:$0xff]
    %v889 = vld [vmem:[#allocation13 + $0xbd0] sm:$0xff]
    %v890 = vld [vmem:[#allocation13 + $0xbd8] sm:$0xff]
    %v891 = vld [vmem:[#allocation13 + $0xbe0] sm:$0xff]
    %v892 = vld [vmem:[#allocation13 + $0xbe8] sm:$0xff]
    %v893 = vld [vmem:[#allocation13 + $0xbf0] sm:$0xff]
    %v894 = vld [vmem:[#allocation13 + $0xbf8] sm:$0xff]
    %895 = vmatpush.msra.mxu0 %v601
    %896 = vmatpush.msra.mxu0 %v595
    %897 = vmatpush.msra.mxu0 %v589
    %898 = vmatpush.msra.mxu0 %v583
    %899 = vmatpush.msra.mxu0 %v577
    %900 = vmatpush.msra.mxu0 %v571
    %901 = vmatpush.msra.mxu0 %v565
    %902 = vmatpush.msra.mxu0 %v559
    %903 = vmatpush.msra.mxu0 %v553
    %904 = vmatpush.msra.mxu0 %v547
    %905 = vmatpush.msra.mxu0 %v541
    %906 = vmatpush.msra.mxu0 %v535
    %907 = vmatpush.msra.mxu0 %v529
    %908 = vmatpush.msra.mxu0 %v523
    %909 = vmatpush.msra.mxu0 %v517
    %910 = vmatpush.msra.mxu0 %v511
    %911 = vmatmul.f32.gmra.mxu0 %v507
    %v912 = vpop.f32.mrf.mxu0
    %v913 = vadd.f32 0.0, %v912
    %914 = vdwg.mxu0
    %915 = vmatpush.msra.mxu0 %v697
    %916 = vmatpush.msra.mxu0 %v691
    %917 = vmatpush.msra.mxu0 %v685
    %918 = vmatpush.msra.mxu0 %v679
    %919 = vmatpush.msra.mxu0 %v673
    %920 = vmatpush.msra.mxu0 %v667
    %921 = vmatpush.msra.mxu0 %v661
    %922 = vmatpush.msra.mxu0 %v655
    %923 = vmatpush.msra.mxu0 %v649
    %924 = vmatpush.msra.mxu0 %v643
    %925 = vmatpush.msra.mxu0 %v637
    %926 = vmatpush.msra.mxu0 %v631
    %927 = vmatpush.msra.mxu0 %v625
    %928 = vmatpush.msra.mxu0 %v619
    %929 = vmatpush.msra.mxu0 %v613
    %930 = vmatpush.msra.mxu0 %v607
    %931 = vmatmul.f32.gmra.mxu0 %v508
    %v932 = vpop.f32.mrf.mxu0
    %v933 = vadd.f32 %v913, %v932
    %934 = vdwg.mxu0
    %935 = vmatpush.msra.mxu0 %v793
    %936 = vmatpush.msra.mxu0 %v787
    %937 = vmatpush.msra.mxu0 %v781
    %938 = vmatpush.msra.mxu0 %v775
    %939 = vmatpush.msra.mxu0 %v769
    %940 = vmatpush.msra.mxu0 %v763
    %941 = vmatpush.msra.mxu0 %v757
    %942 = vmatpush.msra.mxu0 %v751
    %943 = vmatpush.msra.mxu0 %v745
    %944 = vmatpush.msra.mxu0 %v739
    %945 = vmatpush.msra.mxu0 %v733
    %946 = vmatpush.msra.mxu0 %v727
    %947 = vmatpush.msra.mxu0 %v721
    %948 = vmatpush.msra.mxu0 %v715
    %949 = vmatpush.msra.mxu0 %v709
    %950 = vmatpush.msra.mxu0 %v703
    %951 = vmatmul.f32.gmra.mxu0 %v509
    %v952 = vpop.f32.mrf.mxu0
    %v953 = vadd.f32 %v933, %v952
    %954 = vdwg.mxu0
    %955 = vmatpush.msra.mxu0 %v889
    %956 = vmatpush.msra.mxu0 %v883
    %957 = vmatpush.msra.mxu0 %v877
    %958 = vmatpush.msra.mxu0 %v871
    %959 = vmatpush.msra.mxu0 %v865
    %960 = vmatpush.msra.mxu0 %v859
    %961 = vmatpush.msra.mxu0 %v853
    %962 = vmatpush.msra.mxu0 %v847
    %963 = vmatpush.msra.mxu0 %v841
    %964 = vmatpush.msra.mxu0 %v835
    %965 = vmatpush.msra.mxu0 %v829
    %966 = vmatpush.msra.mxu0 %v823
    %967 = vmatpush.msra.mxu0 %v817
    %968 = vmatpush.msra.mxu0 %v811
    %969 = vmatpush.msra.mxu0 %v805
    %970 = vmatpush.msra.mxu0 %v799
    %971 = vmatmul.f32.gmra.mxu0 %v510
    %v972 = vpop.f32.mrf.mxu0
    %v973 = vadd.f32 %v953, %v972
    %974 = vdwg.mxu0
    %975 = vmatpush.msra.mxu0 %v602
    %976 = vmatpush.msra.mxu0 %v596
    %977 = vmatpush.msra.mxu0 %v590
    %978 = vmatpush.msra.mxu0 %v584
    %979 = vmatpush.msra.mxu0 %v578
    %980 = vmatpush.msra.mxu0 %v572
    %981 = vmatpush.msra.mxu0 %v566
    %982 = vmatpush.msra.mxu0 %v560
    %983 = vmatpush.msra.mxu0 %v554
    %984 = vmatpush.msra.mxu0 %v548
    %985 = vmatpush.msra.mxu0 %v542
    %986 = vmatpush.msra.mxu0 %v536
    %987 = vmatpush.msra.mxu0 %v530
    %988 = vmatpush.msra.mxu0 %v524
    %989 = vmatpush.msra.mxu0 %v518
    %990 = vmatpush.msra.mxu0 %v512
    %991 = vmatmul.f32.gmra.mxu0 %v507
    %v992 = vpop.f32.mrf.mxu0
    %v993 = vadd.f32 0.0, %v992
    %994 = vdwg.mxu0
    %995 = vmatpush.msra.mxu0 %v698
    %996 = vmatpush.msra.mxu0 %v692
    %997 = vmatpush.msra.mxu0 %v686
    %998 = vmatpush.msra.mxu0 %v680
    %999 = vmatpush.msra.mxu0 %v674
    %1000 = vmatpush.msra.mxu0 %v668
    %1001 = vmatpush.msra.mxu0 %v662
    %1002 = vmatpush.msra.mxu0 %v656
    %1003 = vmatpush.msra.mxu0 %v650
    %1004 = vmatpush.msra.mxu0 %v644
    %1005 = vmatpush.msra.mxu0 %v638
    %1006 = vmatpush.msra.mxu0 %v632
    %1007 = vmatpush.msra.mxu0 %v626
    %1008 = vmatpush.msra.mxu0 %v620
    %1009 = vmatpush.msra.mxu0 %v614
    %1010 = vmatpush.msra.mxu0 %v608
    %1011 = vmatmul.f32.gmra.mxu0 %v508
    %v1012 = vpop.f32.mrf.mxu0
    %v1013 = vadd.f32 %v993, %v1012
    %1014 = vdwg.mxu0
    %1015 = vmatpush.msra.mxu0 %v794
    %1016 = vmatpush.msra.mxu0 %v788
    %1017 = vmatpush.msra.mxu0 %v782
    %1018 = vmatpush.msra.mxu0 %v776
    %1019 = vmatpush.msra.mxu0 %v770
    %1020 = vmatpush.msra.mxu0 %v764
    %1021 = vmatpush.msra.mxu0 %v758
    %1022 = vmatpush.msra.mxu0 %v752
    %1023 = vmatpush.msra.mxu0 %v746
    %1024 = vmatpush.msra.mxu0 %v740
    %1025 = vmatpush.msra.mxu0 %v734
    %1026 = vmatpush.msra.mxu0 %v728
    %1027 = vmatpush.msra.mxu0 %v722
    %1028 = vmatpush.msra.mxu0 %v716
    %1029 = vmatpush.msra.mxu0 %v710
    %1030 = vmatpush.msra.mxu0 %v704
    %1031 = vmatmul.f32.gmra.mxu0 %v509
    %v1032 = vpop.f32.mrf.mxu0
    %v1033 = vadd.f32 %v1013, %v1032
    %1034 = vdwg.mxu0
    %1035 = vmatpush.msra.mxu0 %v890
    %1036 = vmatpush.msra.mxu0 %v884
    %1037 = vmatpush.msra.mxu0 %v878
    %1038 = vmatpush.msra.mxu0 %v872
    %1039 = vmatpush.msra.mxu0 %v866
    %1040 = vmatpush.msra.mxu0 %v860
    %1041 = vmatpush.msra.mxu0 %v854
    %1042 = vmatpush.msra.mxu0 %v848
    %1043 = vmatpush.msra.mxu0 %v842
    %1044 = vmatpush.msra.mxu0 %v836
    %1045 = vmatpush.msra.mxu0 %v830
    %1046 = vmatpush.msra.mxu0 %v824
    %1047 = vmatpush.msra.mxu0 %v818
    %1048 = vmatpush.msra.mxu0 %v812
    %1049 = vmatpush.msra.mxu0 %v806
    %1050 = vmatpush.msra.mxu0 %v800
    %1051 = vmatmul.f32.gmra.mxu0 %v510
    %v1052 = vpop.f32.mrf.mxu0
    %v1053 = vadd.f32 %v1033, %v1052
    %1054 = vdwg.mxu0
    %1055 = vmatpush.msra.mxu0 %v603
    %1056 = vmatpush.msra.mxu0 %v597
    %1057 = vmatpush.msra.mxu0 %v591
    %1058 = vmatpush.msra.mxu0 %v585
    %1059 = vmatpush.msra.mxu0 %v579
    %1060 = vmatpush.msra.mxu0 %v573
    %1061 = vmatpush.msra.mxu0 %v567
    %1062 = vmatpush.msra.mxu0 %v561
    %1063 = vmatpush.msra.mxu0 %v555
    %1064 = vmatpush.msra.mxu0 %v549
    %1065 = vmatpush.msra.mxu0 %v543
    %1066 = vmatpush.msra.mxu0 %v537
    %1067 = vmatpush.msra.mxu0 %v531
    %1068 = vmatpush.msra.mxu0 %v525
    %1069 = vmatpush.msra.mxu0 %v519
    %1070 = vmatpush.msra.mxu0 %v513
    %1071 = vmatmul.f32.gmra.mxu0 %v507
    %v1072 = vpop.f32.mrf.mxu0
    %v1073 = vadd.f32 0.0, %v1072
    %1074 = vdwg.mxu0
    %1075 = vmatpush.msra.mxu0 %v699
    %1076 = vmatpush.msra.mxu0 %v693
    %1077 = vmatpush.msra.mxu0 %v687
    %1078 = vmatpush.msra.mxu0 %v681
    %1079 = vmatpush.msra.mxu0 %v675
    %1080 = vmatpush.msra.mxu0 %v669
    %1081 = vmatpush.msra.mxu0 %v663
    %1082 = vmatpush.msra.mxu0 %v657
    %1083 = vmatpush.msra.mxu0 %v651
    %1084 = vmatpush.msra.mxu0 %v645
    %1085 = vmatpush.msra.mxu0 %v639
    %1086 = vmatpush.msra.mxu0 %v633
    %1087 = vmatpush.msra.mxu0 %v627
    %1088 = vmatpush.msra.mxu0 %v621
    %1089 = vmatpush.msra.mxu0 %v615
    %1090 = vmatpush.msra.mxu0 %v609
    %1091 = vmatmul.f32.gmra.mxu0 %v508
    %v1092 = vpop.f32.mrf.mxu0
    %v1093 = vadd.f32 %v1073, %v1092
    %1094 = vdwg.mxu0
    %1095 = vmatpush.msra.mxu0 %v795
    %1096 = vmatpush.msra.mxu0 %v789
    %1097 = vmatpush.msra.mxu0 %v783
    %1098 = vmatpush.msra.mxu0 %v777
    %1099 = vmatpush.msra.mxu0 %v771
    %1100 = vmatpush.msra.mxu0 %v765
    %1101 = vmatpush.msra.mxu0 %v759
    %1102 = vmatpush.msra.mxu0 %v753
    %1103 = vmatpush.msra.mxu0 %v747
    %1104 = vmatpush.msra.mxu0 %v741
    %1105 = vmatpush.msra.mxu0 %v735
    %1106 = vmatpush.msra.mxu0 %v729
    %1107 = vmatpush.msra.mxu0 %v723
    %1108 = vmatpush.msra.mxu0 %v717
    %1109 = vmatpush.msra.mxu0 %v711
    %1110 = vmatpush.msra.mxu0 %v705
    %1111 = vmatmul.f32.gmra.mxu0 %v509
    %v1112 = vpop.f32.mrf.mxu0
    %v1113 = vadd.f32 %v1093, %v1112
    %1114 = vdwg.mxu0
    %1115 = vmatpush.msra.mxu0 %v891
    %1116 = vmatpush.msra.mxu0 %v885
    %1117 = vmatpush.msra.mxu0 %v879
    %1118 = vmatpush.msra.mxu0 %v873
    %1119 = vmatpush.msra.mxu0 %v867
    %1120 = vmatpush.msra.mxu0 %v861
    %1121 = vmatpush.msra.mxu0 %v855
    %1122 = vmatpush.msra.mxu0 %v849
    %1123 = vmatpush.msra.mxu0 %v843
    %1124 = vmatpush.msra.mxu0 %v837
    %1125 = vmatpush.msra.mxu0 %v831
    %1126 = vmatpush.msra.mxu0 %v825
    %1127 = vmatpush.msra.mxu0 %v819
    %1128 = vmatpush.msra.mxu0 %v813
    %1129 = vmatpush.msra.mxu0 %v807
    %1130 = vmatpush.msra.mxu0 %v801
    %1131 = vmatmul.f32.gmra.mxu0 %v510
    %v1132 = vpop.f32.mrf.mxu0
    %v1133 = vadd.f32 %v1113, %v1132
    %1134 = vdwg.mxu0
    %1135 = vmatpush.msra.mxu0 %v604
    %1136 = vmatpush.msra.mxu0 %v598
    %1137 = vmatpush.msra.mxu0 %v592
    %1138 = vmatpush.msra.mxu0 %v586
    %1139 = vmatpush.msra.mxu0 %v580
    %1140 = vmatpush.msra.mxu0 %v574
    %1141 = vmatpush.msra.mxu0 %v568
    %1142 = vmatpush.msra.mxu0 %v562
    %1143 = vmatpush.msra.mxu0 %v556
    %1144 = vmatpush.msra.mxu0 %v550
    %1145 = vmatpush.msra.mxu0 %v544
    %1146 = vmatpush.msra.mxu0 %v538
    %1147 = vmatpush.msra.mxu0 %v532
    %1148 = vmatpush.msra.mxu0 %v526
    %1149 = vmatpush.msra.mxu0 %v520
    %1150 = vmatpush.msra.mxu0 %v514
    %1151 = vmatmul.f32.gmra.mxu0 %v507
    %v1152 = vpop.f32.mrf.mxu0
    %v1153 = vadd.f32 0.0, %v1152
    %1154 = vdwg.mxu0
    %1155 = vmatpush.msra.mxu0 %v700
    %1156 = vmatpush.msra.mxu0 %v694
    %1157 = vmatpush.msra.mxu0 %v688
    %1158 = vmatpush.msra.mxu0 %v682
    %1159 = vmatpush.msra.mxu0 %v676
    %1160 = vmatpush.msra.mxu0 %v670
    %1161 = vmatpush.msra.mxu0 %v664
    %1162 = vmatpush.msra.mxu0 %v658
    %1163 = vmatpush.msra.mxu0 %v652
    %1164 = vmatpush.msra.mxu0 %v646
    %1165 = vmatpush.msra.mxu0 %v640
    %1166 = vmatpush.msra.mxu0 %v634
    %1167 = vmatpush.msra.mxu0 %v628
    %1168 = vmatpush.msra.mxu0 %v622
    %1169 = vmatpush.msra.mxu0 %v616
    %1170 = vmatpush.msra.mxu0 %v610
    %1171 = vmatmul.f32.gmra.mxu0 %v508
    %v1172 = vpop.f32.mrf.mxu0
    %v1173 = vadd.f32 %v1153, %v1172
    %1174 = vdwg.mxu0
    %1175 = vmatpush.msra.mxu0 %v796
    %1176 = vmatpush.msra.mxu0 %v790
    %1177 = vmatpush.msra.mxu0 %v784
    %1178 = vmatpush.msra.mxu0 %v778
    %1179 = vmatpush.msra.mxu0 %v772
    %1180 = vmatpush.msra.mxu0 %v766
    %1181 = vmatpush.msra.mxu0 %v760
    %1182 = vmatpush.msra.mxu0 %v754
    %1183 = vmatpush.msra.mxu0 %v748
    %1184 = vmatpush.msra.mxu0 %v742
    %1185 = vmatpush.msra.mxu0 %v736
    %1186 = vmatpush.msra.mxu0 %v730
    %1187 = vmatpush.msra.mxu0 %v724
    %1188 = vmatpush.msra.mxu0 %v718
    %1189 = vmatpush.msra.mxu0 %v712
    %1190 = vmatpush.msra.mxu0 %v706
    %1191 = vmatmul.f32.gmra.mxu0 %v509
    %v1192 = vpop.f32.mrf.mxu0
    %v1193 = vadd.f32 %v1173, %v1192
    %1194 = vdwg.mxu0
    %1195 = vmatpush.msra.mxu0 %v892
    %1196 = vmatpush.msra.mxu0 %v886
    %1197 = vmatpush.msra.mxu0 %v880
    %1198 = vmatpush.msra.mxu0 %v874
    %1199 = vmatpush.msra.mxu0 %v868
    %1200 = vmatpush.msra.mxu0 %v862
    %1201 = vmatpush.msra.mxu0 %v856
    %1202 = vmatpush.msra.mxu0 %v850
    %1203 = vmatpush.msra.mxu0 %v844
    %1204 = vmatpush.msra.mxu0 %v838
    %1205 = vmatpush.msra.mxu0 %v832
    %1206 = vmatpush.msra.mxu0 %v826
    %1207 = vmatpush.msra.mxu0 %v820
    %1208 = vmatpush.msra.mxu0 %v814
    %1209 = vmatpush.msra.mxu0 %v808
    %1210 = vmatpush.msra.mxu0 %v802
    %1211 = vmatmul.f32.gmra.mxu0 %v510
    %v1212 = vpop.f32.mrf.mxu0
    %v1213 = vadd.f32 %v1193, %v1212
    %1214 = vdwg.mxu0
    %1215 = vmatpush.msra.mxu0 %v605
    %1216 = vmatpush.msra.mxu0 %v599
    %1217 = vmatpush.msra.mxu0 %v593
    %1218 = vmatpush.msra.mxu0 %v587
    %1219 = vmatpush.msra.mxu0 %v581
    %1220 = vmatpush.msra.mxu0 %v575
    %1221 = vmatpush.msra.mxu0 %v569
    %1222 = vmatpush.msra.mxu0 %v563
    %1223 = vmatpush.msra.mxu0 %v557
    %1224 = vmatpush.msra.mxu0 %v551
    %1225 = vmatpush.msra.mxu0 %v545
    %1226 = vmatpush.msra.mxu0 %v539
    %1227 = vmatpush.msra.mxu0 %v533
    %1228 = vmatpush.msra.mxu0 %v527
    %1229 = vmatpush.msra.mxu0 %v521
    %1230 = vmatpush.msra.mxu0 %v515
    %1231 = vmatmul.f32.gmra.mxu0 %v507
    %v1232 = vpop.f32.mrf.mxu0
    %v1233 = vadd.f32 0.0, %v1232
    %1234 = vdwg.mxu0
    %1235 = vmatpush.msra.mxu0 %v701
    %1236 = vmatpush.msra.mxu0 %v695
    %1237 = vmatpush.msra.mxu0 %v689
    %1238 = vmatpush.msra.mxu0 %v683
    %1239 = vmatpush.msra.mxu0 %v677
    %1240 = vmatpush.msra.mxu0 %v671
    %1241 = vmatpush.msra.mxu0 %v665
    %1242 = vmatpush.msra.mxu0 %v659
    %1243 = vmatpush.msra.mxu0 %v653
    %1244 = vmatpush.msra.mxu0 %v647
    %1245 = vmatpush.msra.mxu0 %v641
    %1246 = vmatpush.msra.mxu0 %v635
    %1247 = vmatpush.msra.mxu0 %v629
    %1248 = vmatpush.msra.mxu0 %v623
    %1249 = vmatpush.msra.mxu0 %v617
    %1250 = vmatpush.msra.mxu0 %v611
    %1251 = vmatmul.f32.gmra.mxu0 %v508
    %v1252 = vpop.f32.mrf.mxu0
    %v1253 = vadd.f32 %v1233, %v1252
    %1254 = vdwg.mxu0
    %1255 = vmatpush.msra.mxu0 %v797
    %1256 = vmatpush.msra.mxu0 %v791
    %1257 = vmatpush.msra.mxu0 %v785
    %1258 = vmatpush.msra.mxu0 %v779
    %1259 = vmatpush.msra.mxu0 %v773
    %1260 = vmatpush.msra.mxu0 %v767
    %1261 = vmatpush.msra.mxu0 %v761
    %1262 = vmatpush.msra.mxu0 %v755
    %1263 = vmatpush.msra.mxu0 %v749
    %1264 = vmatpush.msra.mxu0 %v743
    %1265 = vmatpush.msra.mxu0 %v737
    %1266 = vmatpush.msra.mxu0 %v731
    %1267 = vmatpush.msra.mxu0 %v725
    %1268 = vmatpush.msra.mxu0 %v719
    %1269 = vmatpush.msra.mxu0 %v713
    %1270 = vmatpush.msra.mxu0 %v707
    %1271 = vmatmul.f32.gmra.mxu0 %v509
    %v1272 = vpop.f32.mrf.mxu0
    %v1273 = vadd.f32 %v1253, %v1272
    %1274 = vdwg.mxu0
    %1275 = vmatpush.msra.mxu0 %v893
    %1276 = vmatpush.msra.mxu0 %v887
    %1277 = vmatpush.msra.mxu0 %v881
    %1278 = vmatpush.msra.mxu0 %v875
    %1279 = vmatpush.msra.mxu0 %v869
    %1280 = vmatpush.msra.mxu0 %v863
    %1281 = vmatpush.msra.mxu0 %v857
    %1282 = vmatpush.msra.mxu0 %v851
    %1283 = vmatpush.msra.mxu0 %v845
    %1284 = vmatpush.msra.mxu0 %v839
    %1285 = vmatpush.msra.mxu0 %v833
    %1286 = vmatpush.msra.mxu0 %v827
    %1287 = vmatpush.msra.mxu0 %v821
    %1288 = vmatpush.msra.mxu0 %v815
    %1289 = vmatpush.msra.mxu0 %v809
    %1290 = vmatpush.msra.mxu0 %v803
    %1291 = vmatmul.f32.gmra.mxu0 %v510
    %v1292 = vpop.f32.mrf.mxu0
    %v1293 = vadd.f32 %v1273, %v1292
    %1294 = vdwg.mxu0
    %1295 = vmatpush.msra.mxu0 %v606
    %1296 = vmatpush.msra.mxu0 %v600
    %1297 = vmatpush.msra.mxu0 %v594
    %1298 = vmatpush.msra.mxu0 %v588
    %1299 = vmatpush.msra.mxu0 %v582
    %1300 = vmatpush.msra.mxu0 %v576
    %1301 = vmatpush.msra.mxu0 %v570
    %1302 = vmatpush.msra.mxu0 %v564
    %1303 = vmatpush.msra.mxu0 %v558
    %1304 = vmatpush.msra.mxu0 %v552
    %1305 = vmatpush.msra.mxu0 %v546
    %1306 = vmatpush.msra.mxu0 %v540
    %1307 = vmatpush.msra.mxu0 %v534
    %1308 = vmatpush.msra.mxu0 %v528
    %1309 = vmatpush.msra.mxu0 %v522
    %1310 = vmatpush.msra.mxu0 %v516
    %1311 = vmatmul.f32.gmra.mxu0 %v507
    %v1312 = vpop.f32.mrf.mxu0
    %v1313 = vadd.f32 0.0, %v1312
    %1314 = vdwg.mxu0
    %1315 = vmatpush.msra.mxu0 %v702
    %1316 = vmatpush.msra.mxu0 %v696
    %1317 = vmatpush.msra.mxu0 %v690
    %1318 = vmatpush.msra.mxu0 %v684
    %1319 = vmatpush.msra.mxu0 %v678
    %1320 = vmatpush.msra.mxu0 %v672
    %1321 = vmatpush.msra.mxu0 %v666
    %1322 = vmatpush.msra.mxu0 %v660
    %1323 = vmatpush.msra.mxu0 %v654
    %1324 = vmatpush.msra.mxu0 %v648
    %1325 = vmatpush.msra.mxu0 %v642
    %1326 = vmatpush.msra.mxu0 %v636
    %1327 = vmatpush.msra.mxu0 %v630
    %1328 = vmatpush.msra.mxu0 %v624
    %1329 = vmatpush.msra.mxu0 %v618
    %1330 = vmatpush.msra.mxu0 %v612
    %1331 = vmatmul.f32.gmra.mxu0 %v508
    %v1332 = vpop.f32.mrf.mxu0
    %v1333 = vadd.f32 %v1313, %v1332
    %1334 = vdwg.mxu0
    %1335 = vmatpush.msra.mxu0 %v798
    %1336 = vmatpush.msra.mxu0 %v792
    %1337 = vmatpush.msra.mxu0 %v786
    %1338 = vmatpush.msra.mxu0 %v780
    %1339 = vmatpush.msra.mxu0 %v774
    %1340 = vmatpush.msra.mxu0 %v768
    %1341 = vmatpush.msra.mxu0 %v762
    %1342 = vmatpush.msra.mxu0 %v756
    %1343 = vmatpush.msra.mxu0 %v750
    %1344 = vmatpush.msra.mxu0 %v744
    %1345 = vmatpush.msra.mxu0 %v738
    %1346 = vmatpush.msra.mxu0 %v732
    %1347 = vmatpush.msra.mxu0 %v726
    %1348 = vmatpush.msra.mxu0 %v720
    %1349 = vmatpush.msra.mxu0 %v714
    %1350 = vmatpush.msra.mxu0 %v708
    %1351 = vmatmul.f32.gmra.mxu0 %v509
    %v1352 = vpop.f32.mrf.mxu0
    %v1353 = vadd.f32 %v1333, %v1352
    %1354 = vdwg.mxu0
    %1355 = vmatpush.msra.mxu0 %v894
    %1356 = vmatpush.msra.mxu0 %v888
    %1357 = vmatpush.msra.mxu0 %v882
    %1358 = vmatpush.msra.mxu0 %v876
    %1359 = vmatpush.msra.mxu0 %v870
    %1360 = vmatpush.msra.mxu0 %v864
    %1361 = vmatpush.msra.mxu0 %v858
    %1362 = vmatpush.msra.mxu0 %v852
    %1363 = vmatpush.msra.mxu0 %v846
    %1364 = vmatpush.msra.mxu0 %v840
    %1365 = vmatpush.msra.mxu0 %v834
    %1366 = vmatpush.msra.mxu0 %v828
    %1367 = vmatpush.msra.mxu0 %v822
    %1368 = vmatpush.msra.mxu0 %v816
    %1369 = vmatpush.msra.mxu0 %v810
    %1370 = vmatpush.msra.mxu0 %v804
    %1371 = vmatmul.f32.gmra.mxu0 %v510
    %v1372 = vpop.f32.mrf.mxu0
    %v1373 = vadd.f32 %v1353, %v1372
    %1374 = vdwg.mxu0
    %v1375 = vsub.f32 0.0, %v973
    %v1376 = vsub.f32 0.0, %v1053
    %v1377 = vsub.f32 0.0, %v1133
    %v1378 = vsub.f32 0.0, %v1213
    %v1379 = vsub.f32 0.0, %v1293
    %v1380 = vsub.f32 0.0, %v1373
    %v1381 = vmul.f32 %v1375, 1.442695
    %v1382 = vpow.pop %v1381
    %v1383 = vmul.f32 %v1376, 1.442695
    %v1384 = vpow.pop %v1383
    %v1385 = vmul.f32 %v1377, 1.442695
    %v1386 = vpow.pop %v1385
    %v1387 = vmul.f32 %v1378, 1.442695
    %v1388 = vpow.pop %v1387
    %v1389 = vmul.f32 %v1379, 1.442695
    %v1390 = vpow.pop %v1389
    %v1391 = vmul.f32 %v1380, 1.442695
    %v1392 = vpow.pop %v1391
    %v1393 = vadd.f32 %v1382, 1.0
    %v1394 = vadd.f32 %v1384, 1.0
    %v1395 = vadd.f32 %v1386, 1.0
    %v1396 = vadd.f32 %v1388, 1.0
    %v1397 = vadd.f32 %v1390, 1.0
    %v1398 = vadd.f32 %v1392, 1.0
    %v1399 = vrcp.pop %v1393
    %v1400 = vrcp.pop %v1394
    %v1401 = vrcp.pop %v1395
    %v1402 = vrcp.pop %v1396
    %v1403 = vrcp.pop %v1397
    %v1404 = vrcp.pop %v1398
    %v1411 = vrot.slane %v1400, 6
    %v1412 = vrot.slane %v1401, 4
    %v1413 = vrot.slane %v1402, 2
    %v1414 = vrot.slane %v1404, 6
    %vm1415 = vcmask 1041408
    %v1416 = vsel %vm1415, %v1399, %v1411
    %vm1417 = vcmask 1045508
    %v1418 = vsel %vm1417, %v1412, %v1413
    %vm1419 = vcmask 1043456
    %v1420 = vsel %vm1419, %v1416, %v1418
    %v1421 = vsel %vm1415, %v1403, %v1414
    %1424 = vst [vmem:[#allocation14] sm:$0xff] %v1420
    %1425 = vst [vmem:[#allocation14 + $0x8] sm:$0xf] %v1421
    // Predicated region
    $region58: #{tpu_custom_call.1} parent=1 // pred_check
      _
    $region59: #{tpu_custom_call.1} parent=1 // pred_check_branch
      %1427 = sbr.rel (0) target = $region61
    $region60: #{tpu_custom_call.1} parent=1 // pred_region
      %1429 = vsyncadd [#allocation4], 0
      %s1431 = sshll.u32 [#allocation14], 4
      %s1432 = int_to_ptr.vmem [resolvable:$true] %s1431
      %s1433 = sshll.u32 %s7, 4
      %s1434 = int_to_ptr.hbm [resolvable:$true] %s1433
      %1436 = dma.vmem_to_hbm [thread:$0]  %s1432, 192, %s1434, [#allocation4]
    $region61: #{tpu_custom_call.1} parent=1 // pred_fallthru
      _
    // Predicated region
    $region62: #{tpu_custom_call.1} parent=1 // pred_check
      _
    $region63: #{tpu_custom_call.1} parent=1 // pred_check_branch
      %1438 = sbr.rel (0) target = $region65
    $region64: #{tpu_custom_call.1} parent=1 // pred_region
      %1440 = dma.done [#allocation4], 192
    $region65: #{tpu_custom_call.1} parent=1 // pred_fallthru
      _
    %1441 = vsyncpa [#allocation3], 1
    %1442 = vsyncpa [#allocation6], 1
    %1443 = vsyncpa [#allocation9], 1
    %1444 = vsyncpa [#allocation12], 1
    %1445 = vsyncpa [#allocation4], 1

</llo_original>
